<compile_context>
chip_gen: v7x
topology: tpu7x:2x2x1
jax: 0.10.0
libtpu: 0.0.40
codegen_flags: <defaults>
</compile_context>

<pallas_src>
import functools
import math

import jax
import jax.numpy as jnp
from jax.experimental import pallas as pl
from jax.experimental.pallas import tpu as pltpu


def sa_attn_kernel(x_ref, w_ref, bv_ref, wt_ref, bt_ref,     # inputs
                   y_ref, stats_ref,                          # outputs
                   qk_ref, va_ref, acc_ref,                   # scratch
                   *, tq, proj_chunk):
    qi = pl.program_id(1)
    nq = pl.num_programs(1)
    c4 = qk_ref.shape[0]            # channels // 4
    c = va_ref.shape[0] - 1         # channels (va has an extra "ones" row)
    n = qk_ref.shape[1]             # number of points

    # ---- per-batch prologue: stacked q/k + v projection, chunked over N ----
    @pl.when(qi == 0)
    def _():
        ones_row = jnp.ones((1, proj_chunk), jnp.float32)
        for ci in range(n // proj_chunk):          # static chunk loop
            off = ci * proj_chunk
            xc = x_ref[0, :, pl.ds(off, proj_chunk)].astype(jnp.bfloat16)
            # one MXU pass for both projections: (C4+C, C) @ (C, PCH) -> f32
            proj = jnp.dot(w_ref[...], xc,
                           preferred_element_type=jnp.float32)
            qk_ref[:, pl.ds(off, proj_chunk)] = proj[:c4].astype(jnp.bfloat16)
            v_rows = proj[c4:] + bv_ref[...]                       # (C, PCH)
            # v projection augmented with a row of ones -> the aggregation
            # matmul also produces the attention column sums for free.
            va_ref[:, pl.ds(off, proj_chunk)] = jnp.concatenate(
                [v_rows, ones_row], axis=0).astype(jnp.bfloat16)
        acc_ref[...] = jnp.zeros_like(acc_ref)

    # ---- attention for this query tile -------------------------------------
    q0 = pl.multiple_of(qi * tq, tq)
    q_cols = qk_ref[:, pl.ds(q0, tq)]                              # (C4, TQ)
    # energy[i, j] = sum_c qk[c, q0+i] * qk[c, j]   -> (TQ, N), f32 accumulate
    energy = jax.lax.dot_general(
        q_cols, qk_ref[...], (((0,), (0,)), ((), ())),
        preferred_element_type=jnp.float32)

    # row softmax pieces (the divide is folded into the LHS of the matmul)
    m = jnp.max(energy, axis=-1, keepdims=True)                    # (TQ, 1)
    e = jnp.exp(energy - m)                                        # (TQ, N) f32
    rowsum = jnp.sum(e, axis=-1, keepdims=True)                    # (TQ, 1)
    inv_row = pl.reciprocal(rowsum, approx=True).reshape(1, tq)    # (1, TQ)

    # LHS rows 0..C-1 = v_tile scaled by 1/rowsum, row C = 1/rowsum itself.
    lhs = (va_ref[:, pl.ds(q0, tq)].astype(jnp.float32) * inv_row
           ).astype(jnp.bfloat16)                                  # (C+1, TQ)
    # single MXU pass accumulates x_r (rows :C) and column sums (row C)
    acc_ref[...] += jnp.dot(lhs, e.astype(jnp.bfloat16),
                            preferred_element_type=jnp.float32)    # (C+1, N)

    # ---- finalize: renorm, residual subtract, trans_conv, BN partial sums --
    @pl.when(qi == nq - 1)
    def _():
        colsum = acc_ref[c:c + 1, :]                               # (1, N)
        inv_col = pl.reciprocal(1e-9 + colsum, approx=False)       # exact
        x_r = acc_ref[:c, :] * inv_col                             # (C, N)
        d = (x_ref[0] - x_r).astype(jnp.bfloat16)
        y = jnp.dot(wt_ref[...], d,
                    preferred_element_type=jnp.float32) + bt_ref[...]
        # BatchNorm partial sums in f32 (before the bf16 cast of y),
        # stored lane-dense as two rows of length C.
        s1 = jnp.sum(y, axis=1, keepdims=True).reshape(1, c)       # (1, C)
        s2 = jnp.sum(y * y, axis=1, keepdims=True).reshape(1, c)   # (1, C)
        stats_ref[0] = jnp.concatenate([s1, s2], axis=0)           # (2, C)
        y_ref[0] = y.astype(jnp.bfloat16)


def bn_relu_res_kernel(x_ref, y_ref, scale_ref, shift_ref, out_ref):
    # BatchNorm already reduced to per-channel scale/shift (computed outside).
    yn = y_ref[0].astype(jnp.float32) * scale_ref[...] + shift_ref[...]
    out_ref[0] = x_ref[0] + jnp.maximum(yn, 0.0)


def sa_layer_seg(x, wq, wv, bv, wt, bt, gamma, beta):
    B, C, N = x.shape
    C4 = C // 4
    assert N % 128 == 0, "N must be a multiple of 128 lanes (no ragged path)"

    # Query-tile size: single tile for small/medium N, 512 lanes otherwise.
    # TODO(synk): per-generation tuning — v5e/v6e prefer TQ=N up to ~2K,
    # v7x (64 MiB VMEM) prefers TQ<=256 for very large N.
    TQ = N if N <= 1024 else math.gcd(N, 512)
    NQ = N // TQ
    PCH = math.gcd(N, 1024)           # projection chunk (bounds the f32 temp)

    # stack the (tied) q/k weight with the v weight -> single MXU pass; bf16.
    w_stack = jnp.concatenate([wq, wv], axis=0).astype(jnp.bfloat16)  # (C4+C, C)
    wt_bf = wt.astype(jnp.bfloat16)

    # Explicit VMEM budget (blocks + scratch + softmax temporaries) + headroom.
    est = (2 * C * N * 4 + 2 * C * N * 2            # x f32 / y bf16 blocks (dbl-buf)
           + C4 * N * 2 + (C + 1) * N * 2           # qk / v+ones scratch (bf16)
           + (C + 1) * N * 4                        # x_r + colsum accumulator (f32)
           + 2 * TQ * N * 4 + C * N * 4             # energy/exp temps, y f32
           + (C4 + C) * PCH * 4                     # prologue chunk temp
           + 2 * ((C4 + C) * C * 2 + C * C * 2) + 4 * C * 4)
    vmem_limit = int(min(100 * 2**20, max(32 * 2**20, int(est * 1.5))))

    kernel = functools.partial(sa_attn_kernel, tq=TQ, proj_chunk=PCH)

    y, stats = pl.pallas_call(
        kernel,
        out_shape=(jax.ShapeDtypeStruct((B, C, N), jnp.bfloat16),
                   jax.ShapeDtypeStruct((B, 2, C), jnp.float32)),
        grid=(B, NQ),
        in_specs=[
            pl.BlockSpec((1, C, N), lambda b, q: (b, 0, 0)),
            pl.BlockSpec((C4 + C, C), lambda b, q: (0, 0)),
            pl.BlockSpec((C, 1), lambda b, q: (0, 0)),
            pl.BlockSpec((C, C), lambda b, q: (0, 0)),
            pl.BlockSpec((C, 1), lambda b, q: (0, 0)),
        ],
        out_specs=[
            pl.BlockSpec((1, C, N), lambda b, q: (b, 0, 0)),
            pl.BlockSpec((1, 2, C), lambda b, q: (b, 0, 0)),
        ],
        scratch_shapes=[
            pltpu.VMEM((C4, N), jnp.bfloat16),      # shared q/k projection
            pltpu.VMEM((C + 1, N), jnp.bfloat16),   # v projection + ones row
            pltpu.VMEM((C + 1, N), jnp.float32),    # x_r + colsum accumulator
        ],
        compiler_params=pltpu.CompilerParams(
            dimension_semantics=("parallel", "arbitrary"),
            vmem_limit_bytes=vmem_limit),
    )(x, w_stack, bv, wt_bf, bt)

    # finish BatchNorm1d batch statistics (tiny, (C,)-sized) in plain JAX:
    # training-mode batch stats, biased variance, eps=1e-5.
    cnt = jnp.float32(B * N)
    s1 = jnp.sum(stats[:, 0, :], axis=0)            # (C,) sum of y
    s2 = jnp.sum(stats[:, 1, :], axis=0)            # (C,) sum of y^2
    mean = s1 / cnt
    var = s2 / cnt - mean * mean
    eps = 1e-5
    scale_vec = gamma * jax.lax.rsqrt(var + eps)    # (C,)
    shift_vec = beta - mean * scale_vec             # (C,)
    scale = scale_vec.reshape(C, 1)
    shift = shift_vec.reshape(C, 1)
    # TODO(synk): BatchNorm running_mean/running_var momentum buffers are not
    # tracked (forward-only kernel).

    # kernel 2: memory-bound elementwise pass, tiled over N for pipelining.
    TN = N if N <= 1024 else math.gcd(N, 1024)
    out = pl.pallas_call(
        bn_relu_res_kernel,
        out_shape=jax.ShapeDtypeStruct((B, C, N), jnp.float32),
        grid=(B, N // TN),
        in_specs=[
            pl.BlockSpec((1, C, TN), lambda b, n: (b, 0, n)),
            pl.BlockSpec((1, C, TN), lambda b, n: (b, 0, n)),
            pl.BlockSpec((C, 1), lambda b, n: (0, 0)),
            pl.BlockSpec((C, 1), lambda b, n: (0, 0)),
        ],
        out_specs=pl.BlockSpec((1, C, TN), lambda b, n: (b, 0, n)),
        compiler_params=pltpu.CompilerParams(
            dimension_semantics=("parallel", "parallel")),
    )(x, y, scale, shift)
    return out


def init_params(key, channels):
    C = channels
    C4 = C // 4
    k = jax.random.split(key, 5)
    # Conv1d weights (out, in, 1) -> squeezed to (out, in)
    wq = jax.random.normal(k[0], (C4, C), jnp.float32) * 0.1   # shared q/k weight
    wv = jax.random.normal(k[1], (C, C), jnp.float32) * 0.1
    bv = jax.random.normal(k[2], (C, 1), jnp.float32) * 0.1
    wt = jax.random.normal(k[3], (C, C), jnp.float32) * 0.1
    bt = jax.random.normal(k[4], (C, 1), jnp.float32) * 0.1
    gamma = jnp.ones((C,), jnp.float32)                        # BatchNorm weight
    beta = jnp.zeros((C,), jnp.float32)                        # BatchNorm bias
    return wq, wv, bv, wt, bt, gamma, beta


if __name__ == "__main__":
    B, C, N = 2, 64, 128   # batch, channels, number of points
    key = jax.random.PRNGKey(0)
    kx, kp = jax.random.split(key)
    x = jax.random.normal(kx, (B, C, N), jnp.float32)
    params = init_params(kp, C)

    out = jax.jit(sa_layer_seg)(x, *params)
    jax.block_until_ready(out)
    assert out.shape == (B, C, N) and out.dtype == jnp.float32
    print("KERNEL_OK")
</pallas_src>

<mosaic_0001>
module attributes {stable_mosaic.version = 11 : i64} {
  func.func @sa_attn_kernel(%arg0: i32, %arg1: i32, %arg2: memref<1x64x128xf32, #tpu.memory_space<vmem>>, %arg3: memref<80x64xbf16, #tpu.memory_space<vmem>>, %arg4: memref<64x1xf32, #tpu.memory_space<vmem>>, %arg5: memref<64x64xbf16, #tpu.memory_space<vmem>>, %arg6: memref<64x1xf32, #tpu.memory_space<vmem>>, %arg7: memref<1x64x128xbf16, #tpu.memory_space<vmem>>, %arg8: memref<1x2x64xf32, #tpu.memory_space<vmem>>, %arg9: memref<16x128xbf16, #tpu.memory_space<vmem>>, %arg10: memref<65x128xbf16, #tpu.memory_space<vmem>>, %arg11: memref<65x128xf32, #tpu.memory_space<vmem>>) attributes {dimension_semantics = [#tpu.dimension_semantics<parallel>, #tpu.dimension_semantics<arbitrary>], iteration_bounds = array<i64: 2, 1>, scalar_prefetch = 0 : i64, scratch_operands = 3 : i64, tpu.core_type = #tpu.core_type<tc>, window_params = [{transform_indices = @transform_0, window_bounds = array<i64: 1, 64, 128>}, {pipeline_mode = #tpu.pipeline_mode<synchronous>, transform_indices = @transform_1, window_bounds = array<i64: 80, 64>}, {pipeline_mode = #tpu.pipeline_mode<synchronous>, transform_indices = @transform_2, window_bounds = array<i64: 64, 1>}, {pipeline_mode = #tpu.pipeline_mode<synchronous>, transform_indices = @transform_3, window_bounds = array<i64: 64, 64>}, {pipeline_mode = #tpu.pipeline_mode<synchronous>, transform_indices = @transform_4, window_bounds = array<i64: 64, 1>}, {transform_indices = @transform_5, window_bounds = array<i64: 1, 64, 128>}, {transform_indices = @transform_6, window_bounds = array<i64: 1, 2, 64>}]} {
    %c0_i32 = arith.constant 0 : i32
    %0 = arith.cmpi eq, %arg1, %c0_i32 : i32
    %1 = arith.extui %0 : i1 to i32
    %c0_i32_0 = arith.constant 0 : i32
    %2 = arith.cmpi ne, %1, %c0_i32_0 : i32
    scf.if %2 {
      %cst_13 = arith.constant 1.000000e+00 : f32
      %32 = vector.broadcast %cst_13 : f32 to vector<1x128xf32>
      %c0_14 = arith.constant 0 : index
      %c0_15 = arith.constant 0 : index
      %c0_16 = arith.constant 0 : index
      %33 = vector.load %arg2[%c0_14, %c0_15, %c0_16] : memref<1x64x128xf32, #tpu.memory_space<vmem>>, vector<1x64x128xf32>
      %34 = vector.shape_cast %33 : vector<1x64x128xf32> to vector<64x128xf32>
      %35 = arith.truncf %34 : vector<64x128xf32> to vector<64x128xbf16>
      %c0_17 = arith.constant 0 : index
      %c0_18 = arith.constant 0 : index
      %36 = vector.load %arg3[%c0_17, %c0_18] : memref<80x64xbf16, #tpu.memory_space<vmem>>, vector<80x64xbf16>
      %cst_19 = arith.constant dense<0.000000e+00> : vector<80x128xf32>
      %37 = tpu.matmul %36, %35, %cst_19 {dimension_numbers = #tpu.dot_dimension_numbers<[1], [0], [0], [1], [0, 0, 1, 1], [], []>} : vector<80x64xbf16>, vector<64x128xbf16>, vector<80x128xf32> -> vector<80x128xf32>
      %38 = vector.extract_strided_slice %37 {offsets = [0, 0], sizes = [16, 128], strides = [1, 1]} : vector<80x128xf32> to vector<16x128xf32>
      %39 = arith.truncf %38 : vector<16x128xf32> to vector<16x128xbf16>
      %c0_20 = arith.constant 0 : index
      %c0_21 = arith.constant 0 : index
      %40 = vector.load %arg9[%c0_20, %c0_21] : memref<16x128xbf16, #tpu.memory_space<vmem>>, vector<16x128xbf16>
      tpu.vector_store %arg9[%c0_20, %c0_21], %39 {strides = array<i32>} : memref<16x128xbf16, #tpu.memory_space<vmem>>, vector<16x128xbf16>,
      %41 = vector.extract_strided_slice %37 {offsets = [16, 0], sizes = [64, 128], strides = [1, 1]} : vector<80x128xf32> to vector<64x128xf32>
      %c0_22 = arith.constant 0 : index
      %c0_23 = arith.constant 0 : index
      %42 = vector.load %arg4[%c0_22, %c0_23] : memref<64x1xf32, #tpu.memory_space<vmem>>, vector<64x1xf32>
      %43 = vector.broadcast %42 : vector<64x1xf32> to vector<64x128xf32>
      %44 = arith.addf %41, %43 : vector<64x128xf32>
      %45 = tpu.concatenate %44, %32 in 0 : vector<64x128xf32>, vector<1x128xf32> -> vector<65x128xf32>
      %46 = arith.truncf %45 : vector<65x128xf32> to vector<65x128xbf16>
      %c0_24 = arith.constant 0 : index
      %c0_25 = arith.constant 0 : index
      %47 = vector.load %arg10[%c0_24, %c0_25] : memref<65x128xbf16, #tpu.memory_space<vmem>>, vector<65x128xbf16>
      tpu.vector_store %arg10[%c0_24, %c0_25], %46 {strides = array<i32>} : memref<65x128xbf16, #tpu.memory_space<vmem>>, vector<65x128xbf16>,
      %cst_26 = arith.constant 0.000000e+00 : f32
      %48 = vector.broadcast %cst_26 : f32 to vector<65x128xf32>
      %c0_27 = arith.constant 0 : index
      %c0_28 = arith.constant 0 : index
      %49 = vector.load %arg11[%c0_27, %c0_28] : memref<65x128xf32, #tpu.memory_space<vmem>>, vector<65x128xf32>
      tpu.vector_store %arg11[%c0_27, %c0_28], %48 {strides = array<i32>} : memref<65x128xf32, #tpu.memory_space<vmem>>, vector<65x128xf32>,
    } else {
    }
    %c128_i32 = arith.constant 128 : i32
    %3 = arith.muli %arg1, %c128_i32 : i32
    %4 = tpu.assume_multiple %3, 128 : i32
    %c0 = arith.constant 0 : index
    %5 = arith.index_cast %4 : i32 to index
    %6 = vector.load %arg9[%c0, %5] : memref<16x128xbf16, #tpu.memory_space<vmem>>, vector<16x128xbf16>
    %c0_1 = arith.constant 0 : index
    %c0_2 = arith.constant 0 : index
    %7 = vector.load %arg9[%c0_1, %c0_2] : memref<16x128xbf16, #tpu.memory_space<vmem>>, vector<16x128xbf16>
    %cst = arith.constant dense<0.000000e+00> : vector<128x128xf32>
    %8 = tpu.matmul %6, %7, %cst {dimension_numbers = #tpu.dot_dimension_numbers<[0], [0], [1], [1], [0, 1, 1, 1], [], []>} : vector<16x128xbf16>, vector<16x128xbf16>, vector<128x128xf32> -> vector<128x128xf32>
    %cst_3 = arith.constant dense<0xFF800000> : vector<128xf32>
    %9 = vector.multi_reduction <maximumf>, %8, %cst_3 [1] : vector<128x128xf32> to vector<128xf32>
    %10 = vector.shape_cast %9 : vector<128xf32> to vector<128x1xf32>
    %11 = vector.broadcast %10 : vector<128x1xf32> to vector<128x128xf32>
    %12 = arith.subf %8, %11 : vector<128x128xf32>
    %13 = math.exp %12 : vector<128x128xf32>
    %cst_4 = arith.constant dense<0.000000e+00> : vector<128xf32>
    %14 = vector.multi_reduction <add>, %13, %cst_4 [1] : vector<128x128xf32> to vector<128xf32>
    %15 = vector.shape_cast %14 : vector<128xf32> to vector<128x1xf32>
    %16 = tpu.reciprocal %15 {approx = true} : vector<128x1xf32> -> vector<128x1xf32>
    %17 = vector.shape_cast %16 : vector<128x1xf32> to vector<1x128xf32>
    %c0_5 = arith.constant 0 : index
    %18 = arith.index_cast %4 : i32 to index
    %19 = vector.load %arg10[%c0_5, %18] : memref<65x128xbf16, #tpu.memory_space<vmem>>, vector<65x128xbf16>
    %20 = arith.extf %19 : vector<65x128xbf16> to vector<65x128xf32>
    %21 = vector.broadcast %17 : vector<1x128xf32> to vector<65x128xf32>
    %22 = arith.mulf %20, %21 : vector<65x128xf32>
    %23 = arith.truncf %22 : vector<65x128xf32> to vector<65x128xbf16>
    %c0_6 = arith.constant 0 : index
    %c0_7 = arith.constant 0 : index
    %24 = vector.load %arg11[%c0_6, %c0_7] : memref<65x128xf32, #tpu.memory_space<vmem>>, vector<65x128xf32>
    %25 = arith.truncf %13 : vector<128x128xf32> to vector<128x128xbf16>
    %cst_8 = arith.constant dense<0.000000e+00> : vector<65x128xf32>
    %26 = tpu.matmul %23, %25, %cst_8 {dimension_numbers = #tpu.dot_dimension_numbers<[1], [0], [0], [1], [0, 0, 1, 1], [], []>} : vector<65x128xbf16>, vector<128x128xbf16>, vector<65x128xf32> -> vector<65x128xf32>
    %27 = arith.addf %24, %26 : vector<65x128xf32>
    %c0_9 = arith.constant 0 : index
    %c0_10 = arith.constant 0 : index
    %28 = vector.load %arg11[%c0_9, %c0_10] : memref<65x128xf32, #tpu.memory_space<vmem>>, vector<65x128xf32>
    tpu.vector_store %arg11[%c0_9, %c0_10], %27 {strides = array<i32>} : memref<65x128xf32, #tpu.memory_space<vmem>>, vector<65x128xf32>,
    %c0_i32_11 = arith.constant 0 : i32
    %29 = arith.cmpi eq, %arg1, %c0_i32_11 : i32
    %30 = arith.extui %29 : i1 to i32
    %c0_i32_12 = arith.constant 0 : i32
    %31 = arith.cmpi ne, %30, %c0_i32_12 : i32
    scf.if %31 {
      %c64 = arith.constant 64 : index
      %c0_13 = arith.constant 0 : index
      %32 = vector.load %arg11[%c64, %c0_13] : memref<65x128xf32, #tpu.memory_space<vmem>>, vector<1x128xf32>
      %cst_14 = arith.constant 9.99999971E-10 : f32
      %33 = vector.broadcast %cst_14 : f32 to vector<1x128xf32>
      %34 = arith.addf %33, %32 : vector<1x128xf32>
      %35 = tpu.reciprocal %34 : vector<1x128xf32> -> vector<1x128xf32>
      %c0_15 = arith.constant 0 : index
      %c0_16 = arith.constant 0 : index
      %36 = vector.load %arg11[%c0_15, %c0_16] : memref<65x128xf32, #tpu.memory_space<vmem>>, vector<64x128xf32>
      %37 = vector.broadcast %35 : vector<1x128xf32> to vector<64x128xf32>
      %38 = arith.mulf %36, %37 : vector<64x128xf32>
      %c0_17 = arith.constant 0 : index
      %c0_18 = arith.constant 0 : index
      %c0_19 = arith.constant 0 : index
      %39 = vector.load %arg2[%c0_17, %c0_18, %c0_19] : memref<1x64x128xf32, #tpu.memory_space<vmem>>, vector<1x64x128xf32>
      %40 = vector.shape_cast %39 : vector<1x64x128xf32> to vector<64x128xf32>
      %41 = arith.subf %40, %38 : vector<64x128xf32>
      %42 = arith.truncf %41 : vector<64x128xf32> to vector<64x128xbf16>
      %c0_20 = arith.constant 0 : index
      %c0_21 = arith.constant 0 : index
      %43 = vector.load %arg5[%c0_20, %c0_21] : memref<64x64xbf16, #tpu.memory_space<vmem>>, vector<64x64xbf16>
      %cst_22 = arith.constant dense<0.000000e+00> : vector<64x128xf32>
      %44 = tpu.matmul %43, %42, %cst_22 {dimension_numbers = #tpu.dot_dimension_numbers<[1], [0], [0], [1], [0, 0, 1, 1], [], []>} : vector<64x64xbf16>, vector<64x128xbf16>, vector<64x128xf32> -> vector<64x128xf32>
      %c0_23 = arith.constant 0 : index
      %c0_24 = arith.constant 0 : index
      %45 = vector.load %arg6[%c0_23, %c0_24] : memref<64x1xf32, #tpu.memory_space<vmem>>, vector<64x1xf32>
      %46 = vector.broadcast %45 : vector<64x1xf32> to vector<64x128xf32>
      %47 = arith.addf %44, %46 : vector<64x128xf32>
      %cst_25 = arith.constant dense<0.000000e+00> : vector<64xf32>
      %48 = vector.multi_reduction <add>, %47, %cst_25 [1] : vector<64x128xf32> to vector<64xf32>
      %49 = vector.shape_cast %48 : vector<64xf32> to vector<64x1xf32>
      %50 = vector.shape_cast %49 : vector<64x1xf32> to vector<1x64xf32>
      %51 = arith.mulf %47, %47 : vector<64x128xf32>
      %cst_26 = arith.constant dense<0.000000e+00> : vector<64xf32>
      %52 = vector.multi_reduction <add>, %51, %cst_26 [1] : vector<64x128xf32> to vector<64xf32>
      %53 = vector.shape_cast %52 : vector<64xf32> to vector<64x1xf32>
      %54 = vector.shape_cast %53 : vector<64x1xf32> to vector<1x64xf32>
      %55 = tpu.concatenate %50, %54 in 0 : vector<1x64xf32>, vector<1x64xf32> -> vector<2x64xf32>
      %c0_27 = arith.constant 0 : index
      %c0_28 = arith.constant 0 : index
      %c0_29 = arith.constant 0 : index
      %56 = vector.load %arg8[%c0_27, %c0_28, %c0_29] : memref<1x2x64xf32, #tpu.memory_space<vmem>>, vector<1x2x64xf32>
      %57 = vector.shape_cast %56 : vector<1x2x64xf32> to vector<2x64xf32>
      %58 = vector.shape_cast %55 : vector<2x64xf32> to vector<1x2x64xf32>
      tpu.vector_store %arg8[%c0_27, %c0_28, %c0_29], %58 {strides = array<i32>} : memref<1x2x64xf32, #tpu.memory_space<vmem>>, vector<1x2x64xf32>,
      %59 = arith.truncf %47 : vector<64x128xf32> to vector<64x128xbf16>
      %c0_30 = arith.constant 0 : index
      %c0_31 = arith.constant 0 : index
      %c0_32 = arith.constant 0 : index
      %60 = vector.load %arg7[%c0_30, %c0_31, %c0_32] : memref<1x64x128xbf16, #tpu.memory_space<vmem>>, vector<1x64x128xbf16>
      %61 = vector.shape_cast %60 : vector<1x64x128xbf16> to vector<64x128xbf16>
      %62 = vector.shape_cast %59 : vector<64x128xbf16> to vector<1x64x128xbf16>
      tpu.vector_store %arg7[%c0_30, %c0_31, %c0_32], %62 {strides = array<i32>} : memref<1x64x128xbf16, #tpu.memory_space<vmem>>, vector<1x64x128xbf16>,
    } else {
    }
    return
  }
  func.func @transform_0(%arg0: i32, %arg1: i32) -> (i32, i32, i32) {
    %c0_i32 = arith.constant 0 : i32
    %c0_i32_0 = arith.constant 0 : i32
    %c0_i32_1 = arith.constant 0 : i32
    return %arg0, %c0_i32, %c0_i32_0 : i32, i32, i32
  }
  func.func @transform_1(%arg0: i32, %arg1: i32) -> (i32, i32) {
    %c0_i32 = arith.constant 0 : i32
    %c0_i32_0 = arith.constant 0 : i32
    %c0_i32_1 = arith.constant 0 : i32
    return %c0_i32, %c0_i32_0 : i32, i32
  }
  func.func @transform_2(%arg0: i32, %arg1: i32) -> (i32, i32) {
    %c0_i32 = arith.constant 0 : i32
    %c0_i32_0 = arith.constant 0 : i32
    %c0_i32_1 = arith.constant 0 : i32
    return %c0_i32, %c0_i32_0 : i32, i32
  }
  func.func @transform_3(%arg0: i32, %arg1: i32) -> (i32, i32) {
    %c0_i32 = arith.constant 0 : i32
    %c0_i32_0 = arith.constant 0 : i32
    %c0_i32_1 = arith.constant 0 : i32
    return %c0_i32, %c0_i32_0 : i32, i32
  }
  func.func @transform_4(%arg0: i32, %arg1: i32) -> (i32, i32) {
    %c0_i32 = arith.constant 0 : i32
    %c0_i32_0 = arith.constant 0 : i32
    %c0_i32_1 = arith.constant 0 : i32
    return %c0_i32, %c0_i32_0 : i32, i32
  }
  func.func @transform_5(%arg0: i32, %arg1: i32) -> (i32, i32, i32) {
    %c0_i32 = arith.constant 0 : i32
    %c0_i32_0 = arith.constant 0 : i32
    %c0_i32_1 = arith.constant 0 : i32
    return %arg0, %c0_i32, %c0_i32_0 : i32, i32, i32
  }
  func.func @transform_6(%arg0: i32, %arg1: i32) -> (i32, i32, i32) {
    %c0_i32 = arith.constant 0 : i32
    %c0_i32_0 = arith.constant 0 : i32
    %c0_i32_1 = arith.constant 0 : i32
    return %arg0, %c0_i32, %c0_i32_0 : i32, i32, i32
  }
}

module attributes {stable_mosaic.version = 11 : i64} {
  func.func @bn_relu_res_kernel(%arg0: i32, %arg1: i32, %arg2: memref<1x64x128xf32, #tpu.memory_space<vmem>>, %arg3: memref<1x64x128xbf16, #tpu.memory_space<vmem>>, %arg4: memref<64x1xf32, #tpu.memory_space<vmem>>, %arg5: memref<64x1xf32, #tpu.memory_space<vmem>>, %arg6: memref<1x64x128xf32, #tpu.memory_space<vmem>>) attributes {dimension_semantics = [#tpu.dimension_semantics<parallel>, #tpu.dimension_semantics<parallel>], iteration_bounds = array<i64: 2, 1>, scalar_prefetch = 0 : i64, scratch_operands = 0 : i64, tpu.core_type = #tpu.core_type<tc>, window_params = [{transform_indices = @transform_0, window_bounds = array<i64: 1, 64, 128>}, {transform_indices = @transform_1, window_bounds = array<i64: 1, 64, 128>}, {pipeline_mode = #tpu.pipeline_mode<synchronous>, transform_indices = @transform_2, window_bounds = array<i64: 64, 1>}, {pipeline_mode = #tpu.pipeline_mode<synchronous>, transform_indices = @transform_3, window_bounds = array<i64: 64, 1>}, {transform_indices = @transform_4, window_bounds = array<i64: 1, 64, 128>}]} {
    %c0 = arith.constant 0 : index
    %c0_0 = arith.constant 0 : index
    %c0_1 = arith.constant 0 : index
    %0 = vector.load %arg3[%c0, %c0_0, %c0_1] : memref<1x64x128xbf16, #tpu.memory_space<vmem>>, vector<1x64x128xbf16>
    %1 = vector.shape_cast %0 : vector<1x64x128xbf16> to vector<64x128xbf16>
    %2 = arith.extf %1 : vector<64x128xbf16> to vector<64x128xf32>
    %c0_2 = arith.constant 0 : index
    %c0_3 = arith.constant 0 : index
    %3 = vector.load %arg4[%c0_2, %c0_3] : memref<64x1xf32, #tpu.memory_space<vmem>>, vector<64x1xf32>
    %4 = vector.broadcast %3 : vector<64x1xf32> to vector<64x128xf32>
    %5 = arith.mulf %2, %4 : vector<64x128xf32>
    %c0_4 = arith.constant 0 : index
    %c0_5 = arith.constant 0 : index
    %6 = vector.load %arg5[%c0_4, %c0_5] : memref<64x1xf32, #tpu.memory_space<vmem>>, vector<64x1xf32>
    %7 = vector.broadcast %6 : vector<64x1xf32> to vector<64x128xf32>
    %8 = arith.addf %5, %7 : vector<64x128xf32>
    %c0_6 = arith.constant 0 : index
    %c0_7 = arith.constant 0 : index
    %c0_8 = arith.constant 0 : index
    %9 = vector.load %arg2[%c0_6, %c0_7, %c0_8] : memref<1x64x128xf32, #tpu.memory_space<vmem>>, vector<1x64x128xf32>
    %10 = vector.shape_cast %9 : vector<1x64x128xf32> to vector<64x128xf32>
    %cst = arith.constant 0.000000e+00 : f32
    %11 = vector.broadcast %cst : f32 to vector<64x128xf32>
    %12 = arith.maximumf %8, %11 : vector<64x128xf32>
    %13 = arith.addf %10, %12 : vector<64x128xf32>
    %c0_9 = arith.constant 0 : index
    %c0_10 = arith.constant 0 : index
    %c0_11 = arith.constant 0 : index
    %14 = vector.load %arg6[%c0_9, %c0_10, %c0_11] : memref<1x64x128xf32, #tpu.memory_space<vmem>>, vector<1x64x128xf32>
    %15 = vector.shape_cast %14 : vector<1x64x128xf32> to vector<64x128xf32>
    %16 = vector.shape_cast %13 : vector<64x128xf32> to vector<1x64x128xf32>
    tpu.vector_store %arg6[%c0_9, %c0_10, %c0_11], %16 {strides = array<i32>} : memref<1x64x128xf32, #tpu.memory_space<vmem>>, vector<1x64x128xf32>,
    return
  }
  func.func @transform_0(%arg0: i32, %arg1: i32) -> (i32, i32, i32) {
    %c0_i32 = arith.constant 0 : i32
    %c0_i32_0 = arith.constant 0 : i32
    return %arg0, %c0_i32, %arg1 : i32, i32, i32
  }
  func.func @transform_1(%arg0: i32, %arg1: i32) -> (i32, i32, i32) {
    %c0_i32 = arith.constant 0 : i32
    %c0_i32_0 = arith.constant 0 : i32
    return %arg0, %c0_i32, %arg1 : i32, i32, i32
  }
  func.func @transform_2(%arg0: i32, %arg1: i32) -> (i32, i32) {
    %c0_i32 = arith.constant 0 : i32
    %c0_i32_0 = arith.constant 0 : i32
    %c0_i32_1 = arith.constant 0 : i32
    return %c0_i32, %c0_i32_0 : i32, i32
  }
  func.func @transform_3(%arg0: i32, %arg1: i32) -> (i32, i32) {
    %c0_i32 = arith.constant 0 : i32
    %c0_i32_0 = arith.constant 0 : i32
    %c0_i32_1 = arith.constant 0 : i32
    return %c0_i32, %c0_i32_0 : i32, i32
  }
  func.func @transform_4(%arg0: i32, %arg1: i32) -> (i32, i32, i32) {
    %c0_i32 = arith.constant 0 : i32
    %c0_i32_0 = arith.constant 0 : i32
    return %arg0, %c0_i32, %arg1 : i32, i32, i32
  }
}

</mosaic_0001>

<llo_original>
// kernel: sa_layer_seg.3
$region0: #{sa_layer_seg.3}
  #allocation0 [shape = 'u32[]', space=smem, size = 0x4, offset = 0x4, fixed_abs, tag = 'smem constant byte address 0x4 - core index']
  #allocation1 [shape = 'u32[144,128]{1,0:T(1,128)}', space=vmem, size = 0x12000, scoped, tag = 'internal scratch']
  %s0 = inlined_call_operand.vmem [shape: f32[2,64,128], index: 0, kind: input, shape index: {}]
  %s1 = inlined_call_operand.vmem [shape: bf16[2,64,128], index: 1, kind: input, shape index: {}]
  %s2 = inlined_call_operand.vmem [shape: f32[64,1], index: 2, kind: input, shape index: {}]
  %s3 = inlined_call_operand.vmem [shape: f32[64,1], index: 3, kind: input, shape index: {}]
  %s4 = inlined_call_operand.hbm [shape: f32[2,64,128], index: 4, kind: output, shape index: {}]
  %s5 = sld [smem:[#allocation0]]
  $region49: #{sa_layer_seg.3} parent=0
    _
  %s7 = ssub.s32 1, %s5
  %s8 = scalar_select 0, %s7, %s5
  $region1: #{sa_layer_seg.3} parent=0
    #allocation2 [shape = 'u8[65536]{0}', space=vmem, size = 0x10000, scoped, tag = 'output window, operand 0']
    #allocation3 [shape = 's32[2]{0}', space=sflag, size = 0x8, scoped, tag = 'scoped memory for sa_layer_seg.3']
    %9 = vsyncpa [#allocation3], 0
    %s10 = scalar_lea.sflag [#allocation3], 1
    %11 = vsyncpa %s10, 0
    loop: start=0, step=1, limit=4
    $region2: #{sa_layer_seg.3} parent=1 // loop_pre_header
      _
    $region3: #{sa_layer_seg.3} parent=1 // loop_header
      %s13 = sphi 0, %s17
      %p14 = scmp.ge.s32.totalorder %s13, 4
      %s20 = sphi 0, %s32
      %s21 = sphi 0, %s28
      %s22 = sphi 0, %s20
      %s23 = sphi 0, %s21
      %s24 = sphi 0, %s22
      %s25 = sphi 0, %s23
      %s37 = sphi 0, %s39
      %s40 = sphi 0, %s37
      %s41 = sphi 0, %s40
      %s57 = sphi 0, %s41
      %s65 = sphi 0, %s67
      %s68 = sphi 0, %s65
      %s69 = sphi 0, %s68
      %s85 = sphi 0, %s69
      %s89 = sphi 0, %s89
      %s91 = sphi 0, %s89
      %s92 = sphi 0, %s91
      %s106 = sphi 0, %s92
      %s110 = sphi 0, %s110
      %s112 = sphi 0, %s110
      %s113 = sphi 0, %s112
      %s127 = sphi 0, %s113
      %s135 = sphi 0, %s137
      %s138 = sphi 0, %s135
      %s139 = sphi 0, %s138
      %s155 = sphi 0, %s139
    $region4: #{sa_layer_seg.3} parent=1 // loop_header_branch
      %16 = sbr.rel (%p14) target = $region8
    $region5: #{sa_layer_seg.3} parent=1 // loop_body
      %s18 = ssub.s32 %s13, 1
      %s19 = ssub.s32 %s13, 2
      %s26 = sadd.s32 1, %s21
      %p27 = scmp.ge.s32.totalorder %s26, 1
      %s28 = scalar_select %p27, 0, %s26
      %s29 = sadd.s32 1, %s20
      %s30 = scalar_select %p27, %s29, %s20
      %p31 = scmp.ge.s32.totalorder %s30, 2
      %s32 = scalar_select %p31, 0, %s30
      %s33 = ssub.s32 %s20, %s32
      %s34 = ssub.s32 %s21, %s28
      %s35 = sor.u32 %s33, %s34
      %p36 = scmp.eq.s32.totalorder %s35, 0
      %s38 = sadd.s32 %s37, 1
      %s39 = scalar_select %p36, %s37, %s38
      %p42 = pneg %p36
      %p43 = scmp.eq.s32.totalorder %s13, 1
      %p44 = por %p42, %p43
      %p45 = scmp.ne.s32.totalorder %s37, %s40
      %p46 = scmp.eq.s32.totalorder %s13, 0
      %p47 = por %p45, %p46
      %p48 = scmp.ne.s32.totalorder %s37, %s40
      %p49 = scmp.eq.s32.totalorder %s18, 1
      %p50 = por %p48, %p49
      %p51 = scmp.ne.s32.totalorder %s40, %s41
      %p52 = scmp.eq.s32.totalorder %s18, 0
      %p53 = por %p51, %p52
      %p54 = scmp.ne.s32.totalorder %s40, %s41
      %p55 = scmp.eq.s32.totalorder %s19, 1
      %p56 = por %p54, %p55
      %p58 = scmp.ne.s32.totalorder %s41, %s57
      %p59 = scmp.eq.s32.totalorder %s19, 0
      %p60 = por %p58, %p59
      %s61 = ssub.s32 %s20, %s32
      %s62 = ssub.s32 %s21, %s28
      %s63 = sor.u32 %s61, %s62
      %p64 = scmp.eq.s32.totalorder %s63, 0
      %s66 = sadd.s32 %s65, 1
      %s67 = scalar_select %p64, %s65, %s66
      %p70 = pneg %p64
      %p71 = scmp.eq.s32.totalorder %s13, 1
      %p72 = por %p70, %p71
      %p73 = scmp.ne.s32.totalorder %s65, %s68
      %p74 = scmp.eq.s32.totalorder %s13, 0
      %p75 = por %p73, %p74
      %p76 = scmp.ne.s32.totalorder %s65, %s68
      %p77 = scmp.eq.s32.totalorder %s18, 1
      %p78 = por %p76, %p77
      %p79 = scmp.ne.s32.totalorder %s68, %s69
      %p80 = scmp.eq.s32.totalorder %s18, 0
      %p81 = por %p79, %p80
      %p82 = scmp.ne.s32.totalorder %s68, %s69
      %p83 = scmp.eq.s32.totalorder %s19, 1
      %p84 = por %p82, %p83
      %p86 = scmp.ne.s32.totalorder %s69, %s85
      %p87 = scmp.eq.s32.totalorder %s19, 0
      %p88 = por %p86, %p87
      %s90 = sadd.s32 %s89, 1
      %p93 = scmp.eq.s32.totalorder %s13, 1
      %p94 = scmp.ne.s32.totalorder %s89, %s91
      %p95 = scmp.eq.s32.totalorder %s13, 0
      %p96 = por %p94, %p95
      %p97 = scmp.ne.s32.totalorder %s89, %s91
      %p98 = scmp.eq.s32.totalorder %s18, 1
      %p99 = por %p97, %p98
      %p100 = scmp.ne.s32.totalorder %s91, %s92
      %p101 = scmp.eq.s32.totalorder %s18, 0
      %p102 = por %p100, %p101
      %p103 = scmp.ne.s32.totalorder %s91, %s92
      %p104 = scmp.eq.s32.totalorder %s19, 1
      %p105 = por %p103, %p104
      %p107 = scmp.ne.s32.totalorder %s92, %s106
      %p108 = scmp.eq.s32.totalorder %s19, 0
      %p109 = por %p107, %p108
      %s111 = sadd.s32 %s110, 1
      %p114 = scmp.eq.s32.totalorder %s13, 1
      %p115 = scmp.ne.s32.totalorder %s110, %s112
      %p116 = scmp.eq.s32.totalorder %s13, 0
      %p117 = por %p115, %p116
      %p118 = scmp.ne.s32.totalorder %s110, %s112
      %p119 = scmp.eq.s32.totalorder %s18, 1
      %p120 = por %p118, %p119
      %p121 = scmp.ne.s32.totalorder %s112, %s113
      %p122 = scmp.eq.s32.totalorder %s18, 0
      %p123 = por %p121, %p122
      %p124 = scmp.ne.s32.totalorder %s112, %s113
      %p125 = scmp.eq.s32.totalorder %s19, 1
      %p126 = por %p124, %p125
      %p128 = scmp.ne.s32.totalorder %s113, %s127
      %p129 = scmp.eq.s32.totalorder %s19, 0
      %p130 = por %p128, %p129
      %s131 = ssub.s32 %s20, %s32
      %s132 = ssub.s32 %s21, %s28
      %s133 = sor.u32 %s131, %s132
      %p134 = scmp.eq.s32.totalorder %s133, 0
      %s136 = sadd.s32 %s135, 1
      %s137 = scalar_select %p134, %s135, %s136
      %p140 = pneg %p134
      %p141 = scmp.eq.s32.totalorder %s13, 1
      %p142 = por %p140, %p141
      %p143 = scmp.ne.s32.totalorder %s135, %s138
      %p144 = scmp.eq.s32.totalorder %s13, 0
      %p145 = por %p143, %p144
      %p146 = scmp.ne.s32.totalorder %s135, %s138
      %p147 = scmp.eq.s32.totalorder %s18, 1
      %p148 = por %p146, %p147
      %p149 = scmp.ne.s32.totalorder %s138, %s139
      %p150 = scmp.eq.s32.totalorder %s18, 0
      %p151 = por %p149, %p150
      %p152 = scmp.ne.s32.totalorder %s138, %s139
      %p153 = scmp.eq.s32.totalorder %s19, 1
      %p154 = por %p152, %p153
      %p156 = scmp.ne.s32.totalorder %s139, %s155
      %p157 = scmp.eq.s32.totalorder %s19, 0
      %p158 = por %p156, %p157
      %p159 = scmp.le.s32.totalorder 1, %s13
      %p160 = scmp.lt.s32.totalorder %s13, 3
      %p161 = pnand %p159, %p160
      %p162 = pneg %p161
      // Predicated region
      $region9: #{sa_layer_seg.3} parent=5 // pred_check
        _
      $region10: #{sa_layer_seg.3} parent=5 // pred_check_branch
        %164 = sbr.rel (%p161) target = $region12
      $region11: #{sa_layer_seg.3} parent=5 // pred_region
        %s165 = ssub.s32 %s13, 1
        // Predicated region
        $region13: #{sa_layer_seg.3} parent=11 // pred_check
          %p166 = pneg %p102
        $region14: #{sa_layer_seg.3} parent=11 // pred_check_branch
          %168 = sbr.rel (%p166) target = $region16
        $region15: #{sa_layer_seg.3} parent=11 // pred_region
          _
        $region16: #{sa_layer_seg.3} parent=11 // pred_fallthru
          _
        // Predicated region
        $region17: #{sa_layer_seg.3} parent=11 // pred_check
          %p169 = pneg %p123
        $region18: #{sa_layer_seg.3} parent=11 // pred_check_branch
          %171 = sbr.rel (%p169) target = $region20
        $region19: #{sa_layer_seg.3} parent=11 // pred_region
          _
        $region20: #{sa_layer_seg.3} parent=11 // pred_fallthru
          _
      $region12: #{sa_layer_seg.3} parent=5 // pred_fallthru
        _
      %p172 = scmp.lt.s32.totalorder %s13, 2
      // Predicated region
      $region21: #{sa_layer_seg.3} parent=5 // pred_check
        %p173 = pneg %p172
      $region22: #{sa_layer_seg.3} parent=5 // pred_check_branch
        %175 = sbr.rel (%p173) target = $region24
      $region23: #{sa_layer_seg.3} parent=5 // pred_region
        // Predicated region
        $region25: #{sa_layer_seg.3} parent=23 // pred_check
          %p176 = pneg %p47
        $region26: #{sa_layer_seg.3} parent=23 // pred_check_branch
          %178 = sbr.rel (%p176) target = $region28
        $region27: #{sa_layer_seg.3} parent=23 // pred_region
          %p179 = scmp.lt.s32.totalorder %s20, 1
          %s180 = scalar_select %p179, %s20, 1
          %p181 = scmp.lt.s32.totalorder %s21, 0
          %s182 = scalar_select %p181, %s21, 0
          %s183 = smul.addr %s180, 8
          %s184 = sadd.s32 %s182, %s183
          %s185 = smul.addr %s184, 8
          %s186 = scalar_lea.vmem %s0, %s185
        $region28: #{sa_layer_seg.3} parent=23 // pred_fallthru
          _
        // Predicated region
        $region29: #{sa_layer_seg.3} parent=23 // pred_check
          %p187 = pneg %p75
        $region30: #{sa_layer_seg.3} parent=23 // pred_check_branch
          %189 = sbr.rel (%p187) target = $region32
        $region31: #{sa_layer_seg.3} parent=23 // pred_region
          %p190 = scmp.lt.s32.totalorder %s20, 1
          %s191 = scalar_select %p190, %s20, 1
          %p192 = scmp.lt.s32.totalorder %s21, 0
          %s193 = scalar_select %p192, %s21, 0
          %s194 = smul.addr %s191, 8
          %s195 = sadd.s32 %s193, %s194
          %s196 = smul.addr %s195, 4
          %s197 = scalar_lea.vmem %s1, %s196
        $region32: #{sa_layer_seg.3} parent=23 // pred_fallthru
          _
      $region24: #{sa_layer_seg.3} parent=5 // pred_fallthru
        _
      %p198 = scmp.le.s32.totalorder 1, %s13
      %p199 = scmp.lt.s32.totalorder %s13, 3
      %p200 = pnand %p198, %p199
      %p201 = pneg %p200
      // Predicated region
      $region33: #{sa_layer_seg.3} parent=5 // pred_check
        _
      $region34: #{sa_layer_seg.3} parent=5 // pred_check_branch
        %203 = sbr.rel (%p200) target = $region36
      $region35: #{sa_layer_seg.3} parent=5 // pred_region
        %s204 = ssub.s32 %s13, 1
        %p205 = scmp.lt.s32.totalorder %s22, 1
        %s206 = scalar_select %p205, %s22, 1
        %p207 = scmp.lt.s32.totalorder %s23, 0
        %s208 = scalar_select %p207, %s23, 0
        %s209 = smul.addr %s206, 8
        %s210 = sadd.s32 %s208, %s209
        %s211 = smul.addr %s210, 8
        %s212 = scalar_lea.vmem %s0, %s211
        %p213 = pneg %p53
        %p214 = pneg %p50
        %p215 = scmp.lt.s32.totalorder %s22, 1
        %s216 = scalar_select %p215, %s22, 1
        %p217 = scmp.lt.s32.totalorder %s23, 0
        %s218 = scalar_select %p217, %s23, 0
        %s219 = smul.addr %s216, 8
        %s220 = sadd.s32 %s218, %s219
        %s221 = smul.addr %s220, 4
        %s222 = scalar_lea.vmem %s1, %s221
        %p223 = pneg %p81
        %p224 = pneg %p78
        %p225 = pneg %p102
        %p226 = pneg %p99
        %p227 = pneg %p123
        %p228 = pneg %p120
        %p229 = pneg %p151
        %p230 = pneg %p148
        %s231 = sand.u32 %s138, 1
        %s232 = scalar_lea.sflag [#allocation3], %s231
        %s233 = sand.u32 %s138, 1
        %s234 = smul.addr %s233, 64
        %s235 = scalar_lea.vmem [#allocation2], %s234
        %p236 = scmp.lt.s32.totalorder %s22, 1
        %s237 = scalar_select %p236, %s22, 1
        %p238 = scmp.lt.s32.totalorder %s23, 0
        %s239 = scalar_select %p238, %s23, 0
        %s240 = smul.addr %s237, 8
        %s241 = sadd.s32 %s239, %s240
        %s242 = smul.addr %s241, 8
        %s243 = scalar_lea.vmem %s0, %s242
        %p244 = scmp.lt.s32.totalorder %s22, 1
        %s245 = scalar_select %p244, %s22, 1
        %p246 = scmp.lt.s32.totalorder %s23, 0
        %s247 = scalar_select %p246, %s23, 0
        %s248 = smul.addr %s245, 8
        %s249 = sadd.s32 %s247, %s248
        %s250 = smul.addr %s249, 4
        %s251 = scalar_lea.vmem %s1, %s250
        %v252 = vld [vmem:[%s251] sm:$0xf]
        %v253 = vld [vmem:[%s251 + $0x4] sm:$0xf]
        %v254 = vld [vmem:[%s251 + $0x8] sm:$0xf]
        %v255 = vld [vmem:[%s251 + $0xc] sm:$0xf]
        %v256 = vld [vmem:[%s251 + $0x10] sm:$0xf]
        %v257 = vld [vmem:[%s251 + $0x14] sm:$0xf]
        %v258 = vld [vmem:[%s251 + $0x18] sm:$0xf]
        %v259 = vld [vmem:[%s251 + $0x1c] sm:$0xf]
        %v260 = vunpack.c.l.bf16 %v252
        %v261 = vunpack.c.l.bf16 %v253
        %v262 = vunpack.c.l.bf16 %v254
        %v263 = vunpack.c.l.bf16 %v255
        %v264 = vunpack.c.l.bf16 %v256
        %v265 = vunpack.c.l.bf16 %v257
        %v266 = vunpack.c.l.bf16 %v258
        %v267 = vunpack.c.l.bf16 %v259
        %v268 = vld [vmem:[%s2] sm:$0xff]
        %v269 = vld [vmem:[%s2 + $0x8] sm:$0xff]
        %v270 = vld [vmem:[%s2 + $0x10] sm:$0xff]
        %v271 = vld [vmem:[%s2 + $0x18] sm:$0xff]
        %v272 = vld [vmem:[%s2 + $0x20] sm:$0xff]
        %v273 = vld [vmem:[%s2 + $0x28] sm:$0xff]
        %v274 = vld [vmem:[%s2 + $0x30] sm:$0xff]
        %v275 = vld [vmem:[%s2 + $0x38] sm:$0xff]
        %277 = vset.pattern.permute.xlu0 0
        %278 = vperm.xlu0 %277, %v268
        %v279 = vpop.permute.xlu0 %278
        %282 = vset.pattern.permute.xlu0 0
        %283 = vperm.xlu0 %282, %v269
        %v284 = vpop.permute.xlu0 %283
        %287 = vset.pattern.permute.xlu0 0
        %288 = vperm.xlu0 %287, %v270
        %v289 = vpop.permute.xlu0 %288
        %292 = vset.pattern.permute.xlu0 0
        %293 = vperm.xlu0 %292, %v271
        %v294 = vpop.permute.xlu0 %293
        %297 = vset.pattern.permute.xlu0 0
        %298 = vperm.xlu0 %297, %v272
        %v299 = vpop.permute.xlu0 %298
        %302 = vset.pattern.permute.xlu0 0
        %303 = vperm.xlu0 %302, %v273
        %v304 = vpop.permute.xlu0 %303
        %307 = vset.pattern.permute.xlu0 0
        %308 = vperm.xlu0 %307, %v274
        %v309 = vpop.permute.xlu0 %308
        %312 = vset.pattern.permute.xlu0 0
        %313 = vperm.xlu0 %312, %v275
        %v314 = vpop.permute.xlu0 %313
        %v316 = vmul.f32 %v260, %v279
        %v317 = vmul.f32 %v261, %v284
        %v318 = vmul.f32 %v262, %v289
        %v319 = vmul.f32 %v263, %v294
        %v320 = vmul.f32 %v264, %v299
        %v321 = vmul.f32 %v265, %v304
        %v322 = vmul.f32 %v266, %v309
        %v323 = vmul.f32 %v267, %v314
        %v324 = vld [vmem:[%s3] sm:$0xff]
        %v325 = vld [vmem:[%s3 + $0x8] sm:$0xff]
        %v326 = vld [vmem:[%s3 + $0x10] sm:$0xff]
        %v327 = vld [vmem:[%s3 + $0x18] sm:$0xff]
        %v328 = vld [vmem:[%s3 + $0x20] sm:$0xff]
        %v329 = vld [vmem:[%s3 + $0x28] sm:$0xff]
        %v330 = vld [vmem:[%s3 + $0x30] sm:$0xff]
        %v331 = vld [vmem:[%s3 + $0x38] sm:$0xff]
        %333 = vset.pattern.permute.xlu0 0
        %334 = vperm.xlu0 %333, %v324
        %v335 = vpop.permute.xlu0 %334
        %338 = vset.pattern.permute.xlu0 0
        %339 = vperm.xlu0 %338, %v325
        %v340 = vpop.permute.xlu0 %339
        %343 = vset.pattern.permute.xlu0 0
        %344 = vperm.xlu0 %343, %v326
        %v345 = vpop.permute.xlu0 %344
        %348 = vset.pattern.permute.xlu0 0
        %349 = vperm.xlu0 %348, %v327
        %v350 = vpop.permute.xlu0 %349
        %353 = vset.pattern.permute.xlu0 0
        %354 = vperm.xlu0 %353, %v328
        %v355 = vpop.permute.xlu0 %354
        %358 = vset.pattern.permute.xlu0 0
        %359 = vperm.xlu0 %358, %v329
        %v360 = vpop.permute.xlu0 %359
        %363 = vset.pattern.permute.xlu0 0
        %364 = vperm.xlu0 %363, %v330
        %v365 = vpop.permute.xlu0 %364
        %368 = vset.pattern.permute.xlu0 0
        %369 = vperm.xlu0 %368, %v331
        %v370 = vpop.permute.xlu0 %369
        %v372 = vadd.f32 %v316, %v335
        %v373 = vadd.f32 %v317, %v340
        %v374 = vadd.f32 %v318, %v345
        %v375 = vadd.f32 %v319, %v350
        %v376 = vadd.f32 %v320, %v355
        %v377 = vadd.f32 %v321, %v360
        %v378 = vadd.f32 %v322, %v365
        %v379 = vadd.f32 %v323, %v370
        %v380 = vld [vmem:[%s243] sm:$0xff]
        %v381 = vld [vmem:[%s243 + $0x8] sm:$0xff]
        %v382 = vld [vmem:[%s243 + $0x10] sm:$0xff]
        %v383 = vld [vmem:[%s243 + $0x18] sm:$0xff]
        %v384 = vld [vmem:[%s243 + $0x20] sm:$0xff]
        %v385 = vld [vmem:[%s243 + $0x28] sm:$0xff]
        %v386 = vld [vmem:[%s243 + $0x30] sm:$0xff]
        %v387 = vld [vmem:[%s243 + $0x38] sm:$0xff]
        %v388 = vmax.f32 %v372, 0.0
        %v389 = vmax.f32 %v373, 0.0
        %v390 = vmax.f32 %v374, 0.0
        %v391 = vmax.f32 %v375, 0.0
        %v392 = vmax.f32 %v376, 0.0
        %v393 = vmax.f32 %v377, 0.0
        %v394 = vmax.f32 %v378, 0.0
        %v395 = vmax.f32 %v379, 0.0
        %v396 = vadd.f32 %v380, %v388
        %v397 = vadd.f32 %v381, %v389
        %v398 = vadd.f32 %v382, %v390
        %v399 = vadd.f32 %v383, %v391
        %v400 = vadd.f32 %v384, %v392
        %v401 = vadd.f32 %v385, %v393
        %v402 = vadd.f32 %v386, %v394
        %v403 = vadd.f32 %v387, %v395
        %404 = vst [vmem:[%s235] sm:$0xff] %v396
        %405 = vst [vmem:[%s235 + $0x8] sm:$0xff] %v397
        %406 = vst [vmem:[%s235 + $0x10] sm:$0xff] %v398
        %407 = vst [vmem:[%s235 + $0x18] sm:$0xff] %v399
        %408 = vst [vmem:[%s235 + $0x20] sm:$0xff] %v400
        %409 = vst [vmem:[%s235 + $0x28] sm:$0xff] %v401
        %410 = vst [vmem:[%s235 + $0x30] sm:$0xff] %v402
        %411 = vst [vmem:[%s235 + $0x38] sm:$0xff] %v403
        %s412 = sand.u32 %s138, 1
        %s413 = scalar_lea.sflag [#allocation3], %s412
        %s414 = sand.u32 %s138, 1
        %s415 = smul.addr %s414, 64
        %s416 = scalar_lea.vmem [#allocation2], %s415
        // Predicated region
        $region37: #{sa_layer_seg.3} parent=35 // pred_check
          %p417 = pneg %p148
        $region38: #{sa_layer_seg.3} parent=35 // pred_check_branch
          %419 = sbr.rel (%p417) target = $region40
        $region39: #{sa_layer_seg.3} parent=35 // pred_region
          %s421 = ssub.s32 1024, 1024
          %422 = vsyncadd %s413, %s421
          %s423 = smul.addr %s22, 8
          %s424 = sadd.s32 %s23, %s423
          %s425 = smul.addr %s424, 128
          %s426 = scalar_lea.hbm %s4, %s425
          %s427 = sshll.u32 %s416, 4
          %s428 = int_to_ptr.vmem [resolvable:$true] %s427
          %433 = dma.vmem_to_hbm [thread:$0]  %s428, 1024, %s426, %s413, 128, 128, 8
        $region40: #{sa_layer_seg.3} parent=35 // pred_fallthru
          _
      $region36: #{sa_layer_seg.3} parent=5 // pred_fallthru
        _
      %p434 = scmp.le.s32.totalorder 2, %s13
      // Predicated region
      $region41: #{sa_layer_seg.3} parent=5 // pred_check
        %p435 = pneg %p434
      $region42: #{sa_layer_seg.3} parent=5 // pred_check_branch
        %437 = sbr.rel (%p435) target = $region44
      $region43: #{sa_layer_seg.3} parent=5 // pred_region
        %s438 = ssub.s32 %s13, 2
        // Predicated region
        $region45: #{sa_layer_seg.3} parent=43 // pred_check
          %p439 = pneg %p154
        $region46: #{sa_layer_seg.3} parent=43 // pred_check_branch
          %441 = sbr.rel (%p439) target = $region48
        $region47: #{sa_layer_seg.3} parent=43 // pred_region
          %s442 = sand.u32 %s139, 1
          %s443 = scalar_lea.sflag [#allocation3], %s442
          %s444 = sand.u32 %s139, 1
          %s445 = smul.addr %s444, 64
          %s446 = scalar_lea.vmem [#allocation2], %s445
          %447 = dma.done %s443, 1024
        $region48: #{sa_layer_seg.3} parent=43 // pred_fallthru
          _
      $region44: #{sa_layer_seg.3} parent=5 // pred_fallthru
        _
    $region6: #{sa_layer_seg.3} parent=1 // loop_footer
      %s17 = sadd.s32 1, %s13
    $region7: #{sa_layer_seg.3} parent=1 // loop_footer_branch
      %12 = sbr.rel target = $region3
    $region8: #{sa_layer_seg.3} parent=1 // loop_exit
      _
    %448 = vsyncpa [#allocation3], 1
    %s449 = scalar_lea.sflag [#allocation3], 1
    %450 = vsyncpa %s449, 1

// kernel: sa_layer_seg.2
$region0: #{sa_layer_seg.2}
  #allocation0 [shape = 'u32[]', space=smem, size = 0x4, offset = 0x4, fixed_abs, tag = 'smem constant byte address 0x4 - core index']
  #allocation1 [shape = 'u32[144,128]{1,0:T(1,128)}', space=vmem, size = 0x12000, scoped, tag = 'internal scratch']
  #allocation2 [shape = 'bf16[16,128]{1,0:T(16,128)(2,1)}', space=vmem, size = 0x1000, scoped, tag = 'scratch operand']
  #allocation3 [shape = 'bf16[65,128]{1,0:T(8,128)(2,1)}', space=vmem, size = 0x4800, scoped, tag = 'scratch operand']
  #allocation4 [shape = 'f32[65,128]{1,0:T(8,128)}', space=vmem, size = 0x9000, scoped, tag = 'scratch operand']
  %s0 = inlined_call_operand.vmem [shape: f32[2,64,128], index: 0, kind: input, shape index: {}]
  %s1 = inlined_call_operand.vmem [shape: bf16[80,64], index: 1, kind: input, shape index: {}]
  %s2 = inlined_call_operand.vmem [shape: f32[64,1], index: 2, kind: input, shape index: {}]
  %s3 = inlined_call_operand.vmem [shape: bf16[64,64], index: 3, kind: input, shape index: {}]
  %s4 = inlined_call_operand.vmem [shape: f32[64,1], index: 4, kind: input, shape index: {}]
  %s5 = inlined_call_operand.vmem [shape: bf16[2,64,128], index: 5, kind: output, shape index: {0}]
  %s6 = inlined_call_operand.vmem [shape: f32[2,2,64], index: 6, kind: output, shape index: {1}]
  %7 = xla_tuple %s5, %s6
  %s8 = sld [smem:[#allocation0]]
  $region69: #{sa_layer_seg.2} parent=0
    _
  %s10 = ssub.s32 1, %s8
  %s11 = scalar_select 0, %s10, %s8
  loop: start=0, step=1, limit=4
  $region2: #{sa_layer_seg.2} parent=0 // loop_pre_header
    _
  $region3: #{sa_layer_seg.2} parent=0 // loop_header
    %s13 = sphi 0, %s17
    %p14 = scmp.ge.s32.totalorder %s13, 4
    %s20 = sphi 0, %s32
    %s21 = sphi 0, %s28
    %s22 = sphi 0, %s20
    %s23 = sphi 0, %s21
    %s24 = sphi 0, %s22
    %s25 = sphi 0, %s23
    %s35 = sphi 0, %s37
    %s38 = sphi 0, %s35
    %s39 = sphi 0, %s38
    %s55 = sphi 0, %s39
    %s59 = sphi 0, %s59
    %s61 = sphi 0, %s59
    %s62 = sphi 0, %s61
    %s76 = sphi 0, %s62
    %s80 = sphi 0, %s80
    %s82 = sphi 0, %s80
    %s83 = sphi 0, %s82
    %s97 = sphi 0, %s83
    %s101 = sphi 0, %s101
    %s103 = sphi 0, %s101
    %s104 = sphi 0, %s103
    %s118 = sphi 0, %s104
    %s122 = sphi 0, %s122
    %s124 = sphi 0, %s122
    %s125 = sphi 0, %s124
    %s139 = sphi 0, %s125
    %s145 = sphi 0, %s147
    %s148 = sphi 0, %s145
    %s149 = sphi 0, %s148
    %s165 = sphi 0, %s149
    %s171 = sphi 0, %s173
    %s174 = sphi 0, %s171
    %s175 = sphi 0, %s174
    %s191 = sphi 0, %s175
  $region4: #{sa_layer_seg.2} parent=0 // loop_header_branch
    %16 = sbr.rel (%p14) target = $region8
  $region5: #{sa_layer_seg.2} parent=0 // loop_body
    %s18 = ssub.s32 %s13, 1
    %s19 = ssub.s32 %s13, 2
    %s26 = sadd.s32 1, %s21
    %p27 = scmp.ge.s32.totalorder %s26, 1
    %s28 = scalar_select %p27, 0, %s26
    %s29 = sadd.s32 1, %s20
    %s30 = scalar_select %p27, %s29, %s20
    %p31 = scmp.ge.s32.totalorder %s30, 2
    %s32 = scalar_select %p31, 0, %s30
    %s33 = ssub.s32 %s20, %s32
    %p34 = scmp.eq.s32.totalorder %s33, 0
    %s36 = sadd.s32 %s35, 1
    %s37 = scalar_select %p34, %s35, %s36
    %p40 = pneg %p34
    %p41 = scmp.eq.s32.totalorder %s13, 1
    %p42 = por %p40, %p41
    %p43 = scmp.ne.s32.totalorder %s35, %s38
    %p44 = scmp.eq.s32.totalorder %s13, 0
    %p45 = por %p43, %p44
    %p46 = scmp.ne.s32.totalorder %s35, %s38
    %p47 = scmp.eq.s32.totalorder %s18, 1
    %p48 = por %p46, %p47
    %p49 = scmp.ne.s32.totalorder %s38, %s39
    %p50 = scmp.eq.s32.totalorder %s18, 0
    %p51 = por %p49, %p50
    %p52 = scmp.ne.s32.totalorder %s38, %s39
    %p53 = scmp.eq.s32.totalorder %s19, 1
    %p54 = por %p52, %p53
    %p56 = scmp.ne.s32.totalorder %s39, %s55
    %p57 = scmp.eq.s32.totalorder %s19, 0
    %p58 = por %p56, %p57
    %s60 = sadd.s32 %s59, 1
    %p63 = scmp.eq.s32.totalorder %s13, 1
    %p64 = scmp.ne.s32.totalorder %s59, %s61
    %p65 = scmp.eq.s32.totalorder %s13, 0
    %p66 = por %p64, %p65
    %p67 = scmp.ne.s32.totalorder %s59, %s61
    %p68 = scmp.eq.s32.totalorder %s18, 1
    %p69 = por %p67, %p68
    %p70 = scmp.ne.s32.totalorder %s61, %s62
    %p71 = scmp.eq.s32.totalorder %s18, 0
    %p72 = por %p70, %p71
    %p73 = scmp.ne.s32.totalorder %s61, %s62
    %p74 = scmp.eq.s32.totalorder %s19, 1
    %p75 = por %p73, %p74
    %p77 = scmp.ne.s32.totalorder %s62, %s76
    %p78 = scmp.eq.s32.totalorder %s19, 0
    %p79 = por %p77, %p78
    %s81 = sadd.s32 %s80, 1
    %p84 = scmp.eq.s32.totalorder %s13, 1
    %p85 = scmp.ne.s32.totalorder %s80, %s82
    %p86 = scmp.eq.s32.totalorder %s13, 0
    %p87 = por %p85, %p86
    %p88 = scmp.ne.s32.totalorder %s80, %s82
    %p89 = scmp.eq.s32.totalorder %s18, 1
    %p90 = por %p88, %p89
    %p91 = scmp.ne.s32.totalorder %s82, %s83
    %p92 = scmp.eq.s32.totalorder %s18, 0
    %p93 = por %p91, %p92
    %p94 = scmp.ne.s32.totalorder %s82, %s83
    %p95 = scmp.eq.s32.totalorder %s19, 1
    %p96 = por %p94, %p95
    %p98 = scmp.ne.s32.totalorder %s83, %s97
    %p99 = scmp.eq.s32.totalorder %s19, 0
    %p100 = por %p98, %p99
    %s102 = sadd.s32 %s101, 1
    %p105 = scmp.eq.s32.totalorder %s13, 1
    %p106 = scmp.ne.s32.totalorder %s101, %s103
    %p107 = scmp.eq.s32.totalorder %s13, 0
    %p108 = por %p106, %p107
    %p109 = scmp.ne.s32.totalorder %s101, %s103
    %p110 = scmp.eq.s32.totalorder %s18, 1
    %p111 = por %p109, %p110
    %p112 = scmp.ne.s32.totalorder %s103, %s104
    %p113 = scmp.eq.s32.totalorder %s18, 0
    %p114 = por %p112, %p113
    %p115 = scmp.ne.s32.totalorder %s103, %s104
    %p116 = scmp.eq.s32.totalorder %s19, 1
    %p117 = por %p115, %p116
    %p119 = scmp.ne.s32.totalorder %s104, %s118
    %p120 = scmp.eq.s32.totalorder %s19, 0
    %p121 = por %p119, %p120
    %s123 = sadd.s32 %s122, 1
    %p126 = scmp.eq.s32.totalorder %s13, 1
    %p127 = scmp.ne.s32.totalorder %s122, %s124
    %p128 = scmp.eq.s32.totalorder %s13, 0
    %p129 = por %p127, %p128
    %p130 = scmp.ne.s32.totalorder %s122, %s124
    %p131 = scmp.eq.s32.totalorder %s18, 1
    %p132 = por %p130, %p131
    %p133 = scmp.ne.s32.totalorder %s124, %s125
    %p134 = scmp.eq.s32.totalorder %s18, 0
    %p135 = por %p133, %p134
    %p136 = scmp.ne.s32.totalorder %s124, %s125
    %p137 = scmp.eq.s32.totalorder %s19, 1
    %p138 = por %p136, %p137
    %p140 = scmp.ne.s32.totalorder %s125, %s139
    %p141 = scmp.eq.s32.totalorder %s19, 0
    %p142 = por %p140, %p141
    %s143 = ssub.s32 %s20, %s32
    %p144 = scmp.eq.s32.totalorder %s143, 0
    %s146 = sadd.s32 %s145, 1
    %s147 = scalar_select %p144, %s145, %s146
    %p150 = pneg %p144
    %p151 = scmp.eq.s32.totalorder %s13, 1
    %p152 = por %p150, %p151
    %p153 = scmp.ne.s32.totalorder %s145, %s148
    %p154 = scmp.eq.s32.totalorder %s13, 0
    %p155 = por %p153, %p154
    %p156 = scmp.ne.s32.totalorder %s145, %s148
    %p157 = scmp.eq.s32.totalorder %s18, 1
    %p158 = por %p156, %p157
    %p159 = scmp.ne.s32.totalorder %s148, %s149
    %p160 = scmp.eq.s32.totalorder %s18, 0
    %p161 = por %p159, %p160
    %p162 = scmp.ne.s32.totalorder %s148, %s149
    %p163 = scmp.eq.s32.totalorder %s19, 1
    %p164 = por %p162, %p163
    %p166 = scmp.ne.s32.totalorder %s149, %s165
    %p167 = scmp.eq.s32.totalorder %s19, 0
    %p168 = por %p166, %p167
    %s169 = ssub.s32 %s20, %s32
    %p170 = scmp.eq.s32.totalorder %s169, 0
    %s172 = sadd.s32 %s171, 1
    %s173 = scalar_select %p170, %s171, %s172
    %p176 = pneg %p170
    %p177 = scmp.eq.s32.totalorder %s13, 1
    %p178 = por %p176, %p177
    %p179 = scmp.ne.s32.totalorder %s171, %s174
    %p180 = scmp.eq.s32.totalorder %s13, 0
    %p181 = por %p179, %p180
    %p182 = scmp.ne.s32.totalorder %s171, %s174
    %p183 = scmp.eq.s32.totalorder %s18, 1
    %p184 = por %p182, %p183
    %p185 = scmp.ne.s32.totalorder %s174, %s175
    %p186 = scmp.eq.s32.totalorder %s18, 0
    %p187 = por %p185, %p186
    %p188 = scmp.ne.s32.totalorder %s174, %s175
    %p189 = scmp.eq.s32.totalorder %s19, 1
    %p190 = por %p188, %p189
    %p192 = scmp.ne.s32.totalorder %s175, %s191
    %p193 = scmp.eq.s32.totalorder %s19, 0
    %p194 = por %p192, %p193
    %p195 = scmp.le.s32.totalorder 1, %s13
    %p196 = scmp.lt.s32.totalorder %s13, 3
    %p197 = pnand %p195, %p196
    %p198 = pneg %p197
    // Predicated region
    $region9: #{sa_layer_seg.2} parent=5 // pred_check
      _
    $region10: #{sa_layer_seg.2} parent=5 // pred_check_branch
      %200 = sbr.rel (%p197) target = $region12
    $region11: #{sa_layer_seg.2} parent=5 // pred_region
      %s201 = ssub.s32 %s13, 1
      // Predicated region
      $region13: #{sa_layer_seg.2} parent=11 // pred_check
        %p202 = pneg %p72
      $region14: #{sa_layer_seg.2} parent=11 // pred_check_branch
        %204 = sbr.rel (%p202) target = $region16
      $region15: #{sa_layer_seg.2} parent=11 // pred_region
        _
      $region16: #{sa_layer_seg.2} parent=11 // pred_fallthru
        _
      // Predicated region
      $region17: #{sa_layer_seg.2} parent=11 // pred_check
        %p205 = pneg %p93
      $region18: #{sa_layer_seg.2} parent=11 // pred_check_branch
        %207 = sbr.rel (%p205) target = $region20
      $region19: #{sa_layer_seg.2} parent=11 // pred_region
        _
      $region20: #{sa_layer_seg.2} parent=11 // pred_fallthru
        _
      // Predicated region
      $region21: #{sa_layer_seg.2} parent=11 // pred_check
        %p208 = pneg %p114
      $region22: #{sa_layer_seg.2} parent=11 // pred_check_branch
        %210 = sbr.rel (%p208) target = $region24
      $region23: #{sa_layer_seg.2} parent=11 // pred_region
        _
      $region24: #{sa_layer_seg.2} parent=11 // pred_fallthru
        _
      // Predicated region
      $region25: #{sa_layer_seg.2} parent=11 // pred_check
        %p211 = pneg %p135
      $region26: #{sa_layer_seg.2} parent=11 // pred_check_branch
        %213 = sbr.rel (%p211) target = $region28
      $region27: #{sa_layer_seg.2} parent=11 // pred_region
        _
      $region28: #{sa_layer_seg.2} parent=11 // pred_fallthru
        _
    $region12: #{sa_layer_seg.2} parent=5 // pred_fallthru
      _
    %p214 = scmp.lt.s32.totalorder %s13, 2
    // Predicated region
    $region29: #{sa_layer_seg.2} parent=5 // pred_check
      %p215 = pneg %p214
    $region30: #{sa_layer_seg.2} parent=5 // pred_check_branch
      %217 = sbr.rel (%p215) target = $region32
    $region31: #{sa_layer_seg.2} parent=5 // pred_region
      // Predicated region
      $region33: #{sa_layer_seg.2} parent=31 // pred_check
        %p218 = pneg %p45
      $region34: #{sa_layer_seg.2} parent=31 // pred_check_branch
        %220 = sbr.rel (%p218) target = $region36
      $region35: #{sa_layer_seg.2} parent=31 // pred_region
        %p221 = scmp.lt.s32.totalorder %s20, 1
        %s222 = scalar_select %p221, %s20, 1
        %s223 = smul.addr %s222, 8
        %s224 = smul.addr %s223, 8
        %s225 = scalar_lea.vmem %s0, %s224
      $region36: #{sa_layer_seg.2} parent=31 // pred_fallthru
        _
    $region32: #{sa_layer_seg.2} parent=5 // pred_fallthru
      _
    %p226 = scmp.le.s32.totalorder 1, %s13
    %p227 = scmp.lt.s32.totalorder %s13, 3
    %p228 = pnand %p226, %p227
    %p229 = pneg %p228
    // Predicated region
    $region37: #{sa_layer_seg.2} parent=5 // pred_check
      _
    $region38: #{sa_layer_seg.2} parent=5 // pred_check_branch
      %231 = sbr.rel (%p228) target = $region40
    $region39: #{sa_layer_seg.2} parent=5 // pred_region
      %s232 = ssub.s32 %s13, 1
      %p233 = scmp.lt.s32.totalorder %s22, 1
      %s234 = scalar_select %p233, %s22, 1
      %s235 = smul.addr %s234, 8
      %s236 = smul.addr %s235, 8
      %s237 = scalar_lea.vmem %s0, %s236
      %p238 = pneg %p51
      %p239 = pneg %p48
      %p240 = pneg %p72
      %p241 = pneg %p69
      %p242 = pneg %p93
      %p243 = pneg %p90
      %p244 = pneg %p114
      %p245 = pneg %p111
      %p246 = pneg %p135
      %p247 = pneg %p132
      %p248 = pneg %p161
      %p249 = pneg %p158
      %p250 = scmp.lt.s32.totalorder %s22, 1
      %s251 = scalar_select %p250, %s22, 1
      %s252 = smul.addr %s251, 8
      %s253 = smul.addr %s252, 4
      %s254 = scalar_lea.vmem %s5, %s253
      %p255 = pneg %p187
      %p256 = pneg %p184
      %p257 = scmp.lt.s32.totalorder %s22, 1
      %s258 = scalar_select %p257, %s22, 1
      %s259 = smul.addr %s258, 2
      %s260 = scalar_lea.vmem %s6, %s259
      %p261 = scmp.lt.s32.totalorder %s22, 1
      %s262 = scalar_select %p261, %s22, 1
      %s263 = smul.addr %s262, 8
      %s264 = smul.addr %s263, 8
      %s265 = scalar_lea.vmem %s0, %s264
      %p266 = scmp.lt.s32.totalorder %s22, 1
      %s267 = scalar_select %p266, %s22, 1
      %s268 = smul.addr %s267, 8
      %s269 = smul.addr %s268, 4
      %s270 = scalar_lea.vmem %s5, %s269
      %p271 = scmp.lt.s32.totalorder %s22, 1
      %s272 = scalar_select %p271, %s22, 1
      %s273 = smul.addr %s272, 2
      %s274 = scalar_lea.vmem %s6, %s273
      %p276 = scmp.eq.s32.totalorder %s23, 0
      // Predicated region
      $region41: #{sa_layer_seg.2} parent=39 // pred_check
        %p277 = pneg %p276
      $region42: #{sa_layer_seg.2} parent=39 // pred_check_branch
        %279 = sbr.rel (%p277) target = $region44
      $region43: #{sa_layer_seg.2} parent=39 // pred_region
        %v280 = vld [vmem:[%s265] sm:$0xff]
        %v281 = vld [vmem:[%s265 + $0x8] sm:$0xff]
        %v282 = vld [vmem:[%s265 + $0x10] sm:$0xff]
        %v283 = vld [vmem:[%s265 + $0x18] sm:$0xff]
        %v284 = vld [vmem:[%s265 + $0x20] sm:$0xff]
        %v285 = vld [vmem:[%s265 + $0x28] sm:$0xff]
        %v286 = vld [vmem:[%s265 + $0x30] sm:$0xff]
        %v287 = vld [vmem:[%s265 + $0x38] sm:$0xff]
        %v288 = vpack.c.bf16 %v281, %v280
        %v289 = vpack.c.bf16 %v283, %v282
        %v290 = vpack.c.bf16 %v285, %v284
        %v291 = vpack.c.bf16 %v287, %v286
        %v292 = vld [vmem:[%s1] sm:$0xf]
        %v293 = vld [vmem:[%s1 + $0x4] sm:$0xf]
        %v294 = vld [vmem:[%s1 + $0x8] sm:$0xf]
        %v295 = vld [vmem:[%s1 + $0xc] sm:$0xf]
        %v296 = vld [vmem:[%s1 + $0x10] sm:$0xf]
        %v297 = vld [vmem:[%s1 + $0x14] sm:$0xf]
        %v298 = vld [vmem:[%s1 + $0x18] sm:$0xf]
        %v299 = vld [vmem:[%s1 + $0x1c] sm:$0xf]
        %v300 = vld [vmem:[%s1 + $0x20] sm:$0xf]
        %v301 = vld [vmem:[%s1 + $0x24] sm:$0xf]
        %v312 = vunpack.c.l.b16 %v292
        %v313 = vunpack.c.l.b16 %v293
        %v314 = vunpack.c.l.b16 %v294
        %v315 = vunpack.c.l.b16 %v295
        %v316 = vunpack.c.l.b16 %v296
        %v317 = vunpack.c.l.b16 %v297
        %v318 = vunpack.c.l.b16 %v298
        %v319 = vunpack.c.l.b16 %v299
        %v320 = vunpack.c.l.b16 %v300
        %v321 = vunpack.c.l.b16 %v301
        %v322 = vpack.c.b16 %v313, %v312
        %v323 = vpack.c.b16 %v315, %v314
        %v324 = vpack.c.b16 %v317, %v316
        %v325 = vpack.c.b16 %v319, %v318
        %v326 = vpack.c.b16 %v321, %v320
        %vm327 = vcmask 523264
        %v329 = vsel %vm327, %v322, 0
        %v332 = vsel %vm327, %v323, 0
        %v335 = vsel %vm327, %v324, 0
        %v338 = vsel %vm327, %v325, 0
        %v341 = vsel %vm327, %v326, 0
        %343 = vmatprep.subr.bf16.mxu0 0
        %344 = vmatpush1.bf16.msra.mxu0 %v288
        %345 = vmatprep.subr.bf16.mxu0 0
        %346 = vmatpush1.bf16.msra.mxu0 %v289
        %347 = vmatprep.subr.bf16.mxu0 0
        %348 = vmatpush1.bf16.msra.mxu0 %v290
        %349 = vmatprep.subr.bf16.mxu0 0
        %350 = vmatpush1.bf16.msra.mxu0 %v291
        %351 = vmatprep.subr.bf16.mxu0 0
        %352 = vmatpush1.bf16.msra.mxu0 0
        %353 = vmatprep.subr.bf16.mxu0 0
        %354 = vmatpush1.bf16.msra.mxu0 0
        %355 = vmatprep.subr.bf16.mxu0 0
        %356 = vmatpush1.bf16.msra.mxu0 0
        %357 = vmatprep.subr.bf16.mxu0 0
        %358 = vmatpush1.bf16.msra.mxu0 0
        %359 = vmatprep.subr.bf16.mxu0 0
        %360 = vmatpush1.bf16.msra.mxu0 0
        %361 = vmatprep.subr.bf16.mxu0 0
        %362 = vmatpush1.bf16.msra.mxu0 0
        %363 = vmatprep.subr.bf16.mxu0 0
        %364 = vmatpush1.bf16.msra.mxu0 0
        %365 = vmatprep.subr.bf16.mxu0 0
        %366 = vmatpush1.bf16.msra.mxu0 0
        %367 = vmatprep.subr.bf16.mxu0 0
        %368 = vmatpush1.bf16.msra.mxu0 0
        %369 = vmatprep.subr.bf16.mxu0 0
        %370 = vmatpush1.bf16.msra.mxu0 0
        %371 = vmatprep.subr.bf16.mxu0 0
        %372 = vmatpush1.bf16.msra.mxu0 0
        %373 = vmatprep.subr.bf16.mxu0 0
        %374 = vmatpush1.bf16.msra.mxu0 0
        %375 = vmatprep.mubr.bf16.mxu0 0
        %376 = vmatmul.mubr.bf16.gmra.mrb[0].mxu0 %v329
        %v377 = vpop.f32.mrb[0].mxu0
        %v378 = vadd.f32 0.0, %v377
        %v379 = vpop.f32.mrb[0].mxu0
        %v380 = vpop.f32.mrb[0].mxu0
        %v381 = vadd.f32 0.0, %v380
        %v382 = vpop.f32.mrb[0].mxu0
        %383 = vmatprep.mubr.bf16.mxu0 0
        %384 = vmatmul.mubr.bf16.gmra.mrb[0].mxu0 %v332
        %v385 = vpop.f32.mrb[0].mxu0
        %v386 = vadd.f32 0.0, %v385
        %v387 = vpop.f32.mrb[0].mxu0
        %v388 = vpop.f32.mrb[0].mxu0
        %v389 = vadd.f32 0.0, %v388
        %v390 = vpop.f32.mrb[0].mxu0
        %391 = vmatprep.mubr.bf16.mxu0 0
        %392 = vmatmul.mubr.bf16.gmra.mrb[0].mxu0 %v335
        %v393 = vpop.f32.mrb[0].mxu0
        %v394 = vadd.f32 0.0, %v393
        %v395 = vpop.f32.mrb[0].mxu0
        %v396 = vpop.f32.mrb[0].mxu0
        %v397 = vadd.f32 0.0, %v396
        %v398 = vpop.f32.mrb[0].mxu0
        %399 = vmatprep.mubr.bf16.mxu0 0
        %400 = vmatmul.mubr.bf16.gmra.mrb[0].mxu0 %v338
        %v401 = vpop.f32.mrb[0].mxu0
        %v402 = vadd.f32 0.0, %v401
        %v403 = vpop.f32.mrb[0].mxu0
        %v404 = vpop.f32.mrb[0].mxu0
        %v405 = vadd.f32 0.0, %v404
        %v406 = vpop.f32.mrb[0].mxu0
        %407 = vmatprep.mubr.bf16.mxu0 0
        %408 = vmatmul.mubr.bf16.gmra.mrb[0].mxu0 %v341
        %v409 = vpop.f32.mrb[0].mxu0
        %v410 = vadd.f32 0.0, %v409
        %v411 = vpop.f32.mrb[0].mxu0
        %v412 = vpop.f32.mrb[0].mxu0
        %v413 = vadd.f32 0.0, %v412
        %v414 = vpop.f32.mrb[0].mxu0
        %415 = vdwg.mxu0
        %v416 = vpack.c.bf16 %v381, %v378
        %417 = vst [vmem:[#allocation2] sm:$0xff] %v416
        %v418 = vld [vmem:[%s2] sm:$0xff]
        %v419 = vld [vmem:[%s2 + $0x8] sm:$0xff]
        %v420 = vld [vmem:[%s2 + $0x10] sm:$0xff]
        %v421 = vld [vmem:[%s2 + $0x18] sm:$0xff]
        %v422 = vld [vmem:[%s2 + $0x20] sm:$0xff]
        %v423 = vld [vmem:[%s2 + $0x28] sm:$0xff]
        %v424 = vld [vmem:[%s2 + $0x30] sm:$0xff]
        %v425 = vld [vmem:[%s2 + $0x38] sm:$0xff]
        %427 = vset.pattern.permute.xlu0 0
        %428 = vperm.xlu0 %427, %v418
        %v429 = vpop.permute.xlu0 %428
        %432 = vset.pattern.permute.xlu0 0
        %433 = vperm.xlu0 %432, %v419
        %v434 = vpop.permute.xlu0 %433
        %437 = vset.pattern.permute.xlu0 0
        %438 = vperm.xlu0 %437, %v420
        %v439 = vpop.permute.xlu0 %438
        %442 = vset.pattern.permute.xlu0 0
        %443 = vperm.xlu0 %442, %v421
        %v444 = vpop.permute.xlu0 %443
        %447 = vset.pattern.permute.xlu0 0
        %448 = vperm.xlu0 %447, %v422
        %v449 = vpop.permute.xlu0 %448
        %452 = vset.pattern.permute.xlu0 0
        %453 = vperm.xlu0 %452, %v423
        %v454 = vpop.permute.xlu0 %453
        %457 = vset.pattern.permute.xlu0 0
        %458 = vperm.xlu0 %457, %v424
        %v459 = vpop.permute.xlu0 %458
        %462 = vset.pattern.permute.xlu0 0
        %463 = vperm.xlu0 %462, %v425
        %v464 = vpop.permute.xlu0 %463
        %v466 = vadd.f32 %v386, %v429
        %v467 = vadd.f32 %v389, %v434
        %v468 = vadd.f32 %v394, %v439
        %v469 = vadd.f32 %v397, %v444
        %v470 = vadd.f32 %v402, %v449
        %v471 = vadd.f32 %v405, %v454
        %v472 = vadd.f32 %v410, %v459
        %v473 = vadd.f32 %v413, %v464
        %v474 = vpack.c.bf16 %v467, %v466
        %v475 = vpack.c.bf16 %v469, %v468
        %v476 = vpack.c.bf16 %v471, %v470
        %v477 = vpack.c.bf16 %v473, %v472
        %v478 = vpack.c.bf16 1.0, 1.0
        %v484 = vunpack.c.l.b16 %v474
        %v485 = vunpack.c.h.b16 %v474
        %v486 = vunpack.c.l.b16 %v475
        %v487 = vunpack.c.h.b16 %v475
        %v488 = vunpack.c.l.b16 %v476
        %v489 = vunpack.c.h.b16 %v476
        %v490 = vunpack.c.l.b16 %v477
        %v491 = vunpack.c.h.b16 %v477
        %v492 = vunpack.c.l.b16 %v478
        %v493 = vpack.c.b16 %v484, %v484
        %v494 = vpack.c.b16 %v485, %v485
        %v495 = vpack.c.b16 %v486, %v486
        %v496 = vpack.c.b16 %v487, %v487
        %v497 = vpack.c.b16 %v488, %v488
        %v498 = vpack.c.b16 %v489, %v489
        %v499 = vpack.c.b16 %v490, %v490
        %v500 = vpack.c.b16 %v491, %v491
        %v501 = vpack.c.b16 %v492, %v492
        %511 = vst [vmem:[#allocation3] sm:$0xf] %v493
        %512 = vst [vmem:[#allocation3 + $0x4] sm:$0xf] %v494
        %513 = vst [vmem:[#allocation3 + $0x8] sm:$0xf] %v495
        %514 = vst [vmem:[#allocation3 + $0xc] sm:$0xf] %v496
        %515 = vst [vmem:[#allocation3 + $0x10] sm:$0xf] %v497
        %516 = vst [vmem:[#allocation3 + $0x14] sm:$0xf] %v498
        %517 = vst [vmem:[#allocation3 + $0x18] sm:$0xf] %v499
        %518 = vst [vmem:[#allocation3 + $0x1c] sm:$0xf] %v500
        %vm519 = vcmask 1040384
        %vm520 = vsmask.f32 256
        %vm521 = vmand %vm519, %vm520
        %v522 = vld [vmem:[#allocation3 + $0x20] sm:$0x1]
        %v523 = vsel %vm521, %v501, %v522
        %524 = vst [vmem:[#allocation3 + $0x20] sm:$0x1] %v523
        %525 = vst [vmem:[#allocation4] sm:$0xff] 0.0
        %526 = vst [vmem:[#allocation4 + $0x8] sm:$0xff] 0.0
        %527 = vst [vmem:[#allocation4 + $0x10] sm:$0xff] 0.0
        %528 = vst [vmem:[#allocation4 + $0x18] sm:$0xff] 0.0
        %529 = vst [vmem:[#allocation4 + $0x20] sm:$0xff] 0.0
        %530 = vst [vmem:[#allocation4 + $0x28] sm:$0xff] 0.0
        %531 = vst [vmem:[#allocation4 + $0x30] sm:$0xff] 0.0
        %532 = vst [vmem:[#allocation4 + $0x38] sm:$0xff] 0.0
        %533 = vst [vmem:[#allocation4 + $0x40] sm:$0x1] 0.0
      $region44: #{sa_layer_seg.2} parent=39 // pred_fallthru
        _
      %s534 = smul.u32 %s23, 128
      %s535 = sshra.s32 %s534, 7
      %s536 = sand.u32 %s534, 127
      %s537 = smul.addr %s535, 8
      %s538 = scalar_lea.vmem [#allocation2], %s537
      %v539 = vld [vmem:[%s538] sm:$0xff]
      %v540 = vld [vmem:[#allocation2] sm:$0xff]
      %541 = vxpose.xlu0.c.b16.start [1/8] %v539, 128
      %542 = vxpose.xlu0.c.b16.cont [2/8] 0, 128
      %543 = vxpose.xlu0.c.b16.cont [3/8] 0, 128
      %544 = vxpose.xlu0.c.b16.cont [4/8] 0, 128
      %545 = vxpose.xlu0.c.b16.cont [5/8] 0, 128
      %546 = vxpose.xlu0.c.b16.cont [6/8] 0, 128
      %547 = vxpose.xlu0.c.b16.cont [7/8] 0, 128
      %548 = vxpose.xlu0.c.b16.end [8/8] 0, 128
      %v549 = vpop.trf.xlu0
      %v550 = vpop.trf.xlu0
      %v551 = vpop.trf.xlu0
      %v552 = vpop.trf.xlu0
      %v553 = vpop.trf.xlu0
      %v554 = vpop.trf.xlu0
      %v555 = vpop.trf.xlu0
      %v556 = vpop.trf.xlu0
      %vm557 = vcmask 130048
      %v559 = vsel %vm557, %v549, 0
      %v562 = vsel %vm557, %v550, 0
      %v565 = vsel %vm557, %v551, 0
      %v568 = vsel %vm557, %v552, 0
      %v571 = vsel %vm557, %v553, 0
      %v574 = vsel %vm557, %v554, 0
      %v577 = vsel %vm557, %v555, 0
      %v580 = vsel %vm557, %v556, 0
      %582 = vmatprep.subr.bf16.mxu0 0
      %583 = vmatpush1.bf16.msra.mxu0 %v540
      %584 = vmatprep.subr.bf16.mxu0 0
      %585 = vmatpush1.bf16.msra.mxu0 0
      %586 = vmatprep.subr.bf16.mxu0 0
      %587 = vmatpush1.bf16.msra.mxu0 0
      %588 = vmatprep.subr.bf16.mxu0 0
      %589 = vmatpush1.bf16.msra.mxu0 0
      %590 = vmatprep.subr.bf16.mxu0 0
      %591 = vmatpush1.bf16.msra.mxu0 0
      %592 = vmatprep.subr.bf16.mxu0 0
      %593 = vmatpush1.bf16.msra.mxu0 0
      %594 = vmatprep.subr.bf16.mxu0 0
      %595 = vmatpush1.bf16.msra.mxu0 0
      %596 = vmatprep.subr.bf16.mxu0 0
      %597 = vmatpush1.bf16.msra.mxu0 0
      %598 = vmatprep.subr.bf16.mxu0 0
      %599 = vmatpush1.bf16.msra.mxu0 0
      %600 = vmatprep.subr.bf16.mxu0 0
      %601 = vmatpush1.bf16.msra.mxu0 0
      %602 = vmatprep.subr.bf16.mxu0 0
      %603 = vmatpush1.bf16.msra.mxu0 0
      %604 = vmatprep.subr.bf16.mxu0 0
      %605 = vmatpush1.bf16.msra.mxu0 0
      %606 = vmatprep.subr.bf16.mxu0 0
      %607 = vmatpush1.bf16.msra.mxu0 0
      %608 = vmatprep.subr.bf16.mxu0 0
      %609 = vmatpush1.bf16.msra.mxu0 0
      %610 = vmatprep.subr.bf16.mxu0 0
      %611 = vmatpush1.bf16.msra.mxu0 0
      %612 = vmatprep.subr.bf16.mxu0 0
      %613 = vmatpush1.bf16.msra.mxu0 0
      %614 = vmatprep.mubr.bf16.mxu0 0
      %615 = vmatmul.mubr.bf16.gmra.mrb[0].mxu0 %v559
      %v616 = vpop.f32.mrb[0].mxu0
      %v617 = vadd.f32 0.0, %v616
      %v618 = vpop.f32.mrb[0].mxu0
      %v619 = vpop.f32.mrb[0].mxu0
      %v620 = vadd.f32 0.0, %v619
      %v621 = vpop.f32.mrb[0].mxu0
      %622 = vmatprep.mubr.bf16.mxu0 0
      %623 = vmatmul.mubr.bf16.gmra.mrb[0].mxu0 %v562
      %v624 = vpop.f32.mrb[0].mxu0
      %v625 = vadd.f32 0.0, %v624
      %v626 = vpop.f32.mrb[0].mxu0
      %v627 = vpop.f32.mrb[0].mxu0
      %v628 = vadd.f32 0.0, %v627
      %v629 = vpop.f32.mrb[0].mxu0
      %630 = vmatprep.mubr.bf16.mxu0 0
      %631 = vmatmul.mubr.bf16.gmra.mrb[0].mxu0 %v565
      %v632 = vpop.f32.mrb[0].mxu0
      %v633 = vadd.f32 0.0, %v632
      %v634 = vpop.f32.mrb[0].mxu0
      %v635 = vpop.f32.mrb[0].mxu0
      %v636 = vadd.f32 0.0, %v635
      %v637 = vpop.f32.mrb[0].mxu0
      %638 = vmatprep.mubr.bf16.mxu0 0
      %639 = vmatmul.mubr.bf16.gmra.mrb[0].mxu0 %v568
      %v640 = vpop.f32.mrb[0].mxu0
      %v641 = vadd.f32 0.0, %v640
      %v642 = vpop.f32.mrb[0].mxu0
      %v643 = vpop.f32.mrb[0].mxu0
      %v644 = vadd.f32 0.0, %v643
      %v645 = vpop.f32.mrb[0].mxu0
      %646 = vmatprep.mubr.bf16.mxu0 0
      %647 = vmatmul.mubr.bf16.gmra.mrb[0].mxu0 %v571
      %v648 = vpop.f32.mrb[0].mxu0
      %v649 = vadd.f32 0.0, %v648
      %v650 = vpop.f32.mrb[0].mxu0
      %v651 = vpop.f32.mrb[0].mxu0
      %v652 = vadd.f32 0.0, %v651
      %v653 = vpop.f32.mrb[0].mxu0
      %654 = vmatprep.mubr.bf16.mxu0 0
      %655 = vmatmul.mubr.bf16.gmra.mrb[0].mxu0 %v574
      %v656 = vpop.f32.mrb[0].mxu0
      %v657 = vadd.f32 0.0, %v656
      %v658 = vpop.f32.mrb[0].mxu0
      %v659 = vpop.f32.mrb[0].mxu0
      %v660 = vadd.f32 0.0, %v659
      %v661 = vpop.f32.mrb[0].mxu0
      %662 = vmatprep.mubr.bf16.mxu0 0
      %663 = vmatmul.mubr.bf16.gmra.mrb[0].mxu0 %v577
      %v664 = vpop.f32.mrb[0].mxu0
      %v665 = vadd.f32 0.0, %v664
      %v666 = vpop.f32.mrb[0].mxu0
      %v667 = vpop.f32.mrb[0].mxu0
      %v668 = vadd.f32 0.0, %v667
      %v669 = vpop.f32.mrb[0].mxu0
      %670 = vmatprep.mubr.bf16.mxu0 0
      %671 = vmatmul.mubr.bf16.gmra.mrb[0].mxu0 %v580
      %v672 = vpop.f32.mrb[0].mxu0
      %v673 = vadd.f32 0.0, %v672
      %v674 = vpop.f32.mrb[0].mxu0
      %v675 = vpop.f32.mrb[0].mxu0
      %v676 = vadd.f32 0.0, %v675
      %v677 = vpop.f32.mrb[0].mxu0
      %678 = vdwg.mxu0
      %679 = vmax.xlane.f32.xlu0 %v617
      %v680 = vpop.xlane.xlu0 %679
      %681 = vmax.xlane.f32.xlu0 %v620
      %v682 = vpop.xlane.xlu0 %681
      %683 = vmax.xlane.f32.xlu0 %v625
      %v684 = vpop.xlane.xlu0 %683
      %685 = vmax.xlane.f32.xlu0 %v628
      %v686 = vpop.xlane.xlu0 %685
      %687 = vmax.xlane.f32.xlu0 %v633
      %v688 = vpop.xlane.xlu0 %687
      %689 = vmax.xlane.f32.xlu0 %v636
      %v690 = vpop.xlane.xlu0 %689
      %691 = vmax.xlane.f32.xlu0 %v641
      %v692 = vpop.xlane.xlu0 %691
      %693 = vmax.xlane.f32.xlu0 %v644
      %v694 = vpop.xlane.xlu0 %693
      %695 = vmax.xlane.f32.xlu0 %v649
      %v696 = vpop.xlane.xlu0 %695
      %697 = vmax.xlane.f32.xlu0 %v652
      %v698 = vpop.xlane.xlu0 %697
      %699 = vmax.xlane.f32.xlu0 %v657
      %v700 = vpop.xlane.xlu0 %699
      %701 = vmax.xlane.f32.xlu0 %v660
      %v702 = vpop.xlane.xlu0 %701
      %703 = vmax.xlane.f32.xlu0 %v665
      %v704 = vpop.xlane.xlu0 %703
      %705 = vmax.xlane.f32.xlu0 %v668
      %v706 = vpop.xlane.xlu0 %705
      %707 = vmax.xlane.f32.xlu0 %v673
      %v708 = vpop.xlane.xlu0 %707
      %709 = vmax.xlane.f32.xlu0 %v676
      %v710 = vpop.xlane.xlu0 %709
      %v711 = vsub.f32 %v617, %v680
      %v712 = vsub.f32 %v620, %v682
      %v713 = vsub.f32 %v625, %v684
      %v714 = vsub.f32 %v628, %v686
      %v715 = vsub.f32 %v633, %v688
      %v716 = vsub.f32 %v636, %v690
      %v717 = vsub.f32 %v641, %v692
      %v718 = vsub.f32 %v644, %v694
      %v719 = vsub.f32 %v649, %v696
      %v720 = vsub.f32 %v652, %v698
      %v721 = vsub.f32 %v657, %v700
      %v722 = vsub.f32 %v660, %v702
      %v723 = vsub.f32 %v665, %v704
      %v724 = vsub.f32 %v668, %v706
      %v725 = vsub.f32 %v673, %v708
      %v726 = vsub.f32 %v676, %v710
      %v727 = vmul.f32 %v711, 1.442695
      %v728 = vpow.pop %v727
      %v729 = vmul.f32 %v712, 1.442695
      %v730 = vpow.pop %v729
      %v731 = vmul.f32 %v713, 1.442695
      %v732 = vpow.pop %v731
      %v733 = vmul.f32 %v714, 1.442695
      %v734 = vpow.pop %v733
      %v735 = vmul.f32 %v715, 1.442695
      %v736 = vpow.pop %v735
      %v737 = vmul.f32 %v716, 1.442695
      %v738 = vpow.pop %v737
      %v739 = vmul.f32 %v717, 1.442695
      %v740 = vpow.pop %v739
      %v741 = vmul.f32 %v718, 1.442695
      %v742 = vpow.pop %v741
      %v743 = vmul.f32 %v719, 1.442695
      %v744 = vpow.pop %v743
      %v745 = vmul.f32 %v720, 1.442695
      %v746 = vpow.pop %v745
      %v747 = vmul.f32 %v721, 1.442695
      %v748 = vpow.pop %v747
      %v749 = vmul.f32 %v722, 1.442695
      %v750 = vpow.pop %v749
      %v751 = vmul.f32 %v723, 1.442695
      %v752 = vpow.pop %v751
      %v753 = vmul.f32 %v724, 1.442695
      %v754 = vpow.pop %v753
      %v755 = vmul.f32 %v725, 1.442695
      %v756 = vpow.pop %v755
      %v757 = vmul.f32 %v726, 1.442695
      %v758 = vpow.pop %v757
      %759 = vadd.xlane.f32.xlu0 %v728
      %v760 = vpop.xlane.xlu0 %759
      %761 = vadd.xlane.f32.xlu0 %v730
      %v762 = vpop.xlane.xlu0 %761
      %763 = vadd.xlane.f32.xlu0 %v732
      %v764 = vpop.xlane.xlu0 %763
      %765 = vadd.xlane.f32.xlu0 %v734
      %v766 = vpop.xlane.xlu0 %765
      %767 = vadd.xlane.f32.xlu0 %v736
      %v768 = vpop.xlane.xlu0 %767
      %769 = vadd.xlane.f32.xlu0 %v738
      %v770 = vpop.xlane.xlu0 %769
      %771 = vadd.xlane.f32.xlu0 %v740
      %v772 = vpop.xlane.xlu0 %771
      %773 = vadd.xlane.f32.xlu0 %v742
      %v774 = vpop.xlane.xlu0 %773
      %775 = vadd.xlane.f32.xlu0 %v744
      %v776 = vpop.xlane.xlu0 %775
      %777 = vadd.xlane.f32.xlu0 %v746
      %v778 = vpop.xlane.xlu0 %777
      %779 = vadd.xlane.f32.xlu0 %v748
      %v780 = vpop.xlane.xlu0 %779
      %781 = vadd.xlane.f32.xlu0 %v750
      %v782 = vpop.xlane.xlu0 %781
      %783 = vadd.xlane.f32.xlu0 %v752
      %v784 = vpop.xlane.xlu0 %783
      %785 = vadd.xlane.f32.xlu0 %v754
      %v786 = vpop.xlane.xlu0 %785
      %787 = vadd.xlane.f32.xlu0 %v756
      %v788 = vpop.xlane.xlu0 %787
      %789 = vadd.xlane.f32.xlu0 %v758
      %v790 = vpop.xlane.xlu0 %789
      %v791 = vrcp.pop %v760
      %v792 = vrcp.pop %v762
      %v793 = vrcp.pop %v764
      %v794 = vrcp.pop %v766
      %v795 = vrcp.pop %v768
      %v796 = vrcp.pop %v770
      %v797 = vrcp.pop %v772
      %v798 = vrcp.pop %v774
      %v799 = vrcp.pop %v776
      %v800 = vrcp.pop %v778
      %v801 = vrcp.pop %v780
      %v802 = vrcp.pop %v782
      %v803 = vrcp.pop %v784
      %v804 = vrcp.pop %v786
      %v805 = vrcp.pop %v788
      %v806 = vrcp.pop %v790
      %s807 = smul.addr %s535, 4
      %s808 = scalar_lea.vmem [#allocation3], %s807
      %v809 = vld [vmem:[%s808] sm:$0xf]
      %v810 = vld [vmem:[%s808 + $0x4] sm:$0xf]
      %v811 = vld [vmem:[%s808 + $0x8] sm:$0xf]
      %v812 = vld [vmem:[%s808 + $0xc] sm:$0xf]
      %v813 = vld [vmem:[%s808 + $0x10] sm:$0xf]
      %v814 = vld [vmem:[%s808 + $0x14] sm:$0xf]
      %v815 = vld [vmem:[%s808 + $0x18] sm:$0xf]
      %v816 = vld [vmem:[%s808 + $0x1c] sm:$0xf]
      %v817 = vld [vmem:[%s808 + $0x20] sm:$0x1]
      %v818 = vunpack.c.l.bf16 %v809
      %v819 = vunpack.c.l.bf16 %v810
      %v820 = vunpack.c.l.bf16 %v811
      %v821 = vunpack.c.l.bf16 %v812
      %v822 = vunpack.c.l.bf16 %v813
      %v823 = vunpack.c.l.bf16 %v814
      %v824 = vunpack.c.l.bf16 %v815
      %v825 = vunpack.c.l.bf16 %v816
      %v826 = vunpack.c.l.bf16 %v817
      %v843 = vlaneseq
      %v844 = vand.u32 %v843, 127
      %v845 = vlaneseq
      %v846 = vshrl.u32 %v845, 7
      %v847 = vsub.s32 %v844, %v846
      %v848 = vrot.slane %v791, %v847
      %v849 = vadd.s32 %v844, 4294967288
      %v850 = vlaneseq
      %v851 = vshrl.u32 %v850, 7
      %v852 = vsub.s32 %v849, %v851
      %v853 = vrot.slane %v792, %v852
      %vm854 = vcmask 130112
      %v855 = vsel %vm854, %v853, %v848
      %v856 = vadd.s32 %v844, 4294967280
      %v857 = vlaneseq
      %v858 = vshrl.u32 %v857, 7
      %v859 = vsub.s32 %v856, %v858
      %v860 = vrot.slane %v793, %v859
      %vm861 = vcmask 195712
      %v862 = vsel %vm861, %v860, %v855
      %v863 = vadd.s32 %v844, 4294967272
      %v864 = vlaneseq
      %v865 = vshrl.u32 %v864, 7
      %v866 = vsub.s32 %v863, %v865
      %v867 = vrot.slane %v794, %v866
      %vm868 = vcmask 261312
      %v869 = vsel %vm868, %v867, %v862
      %v870 = vadd.s32 %v844, 4294967264
      %v871 = vlaneseq
      %v872 = vshrl.u32 %v871, 7
      %v873 = vsub.s32 %v870, %v872
      %v874 = vrot.slane %v795, %v873
      %vm875 = vcmask 326912
      %v876 = vsel %vm875, %v874, %v869
      %v877 = vadd.s32 %v844, 4294967256
      %v878 = vlaneseq
      %v879 = vshrl.u32 %v878, 7
      %v880 = vsub.s32 %v877, %v879
      %v881 = vrot.slane %v796, %v880
      %vm882 = vcmask 392512
      %v883 = vsel %vm882, %v881, %v876
      %v884 = vadd.s32 %v844, 4294967248
      %v885 = vlaneseq
      %v886 = vshrl.u32 %v885, 7
      %v887 = vsub.s32 %v884, %v886
      %v888 = vrot.slane %v797, %v887
      %vm889 = vcmask 458112
      %v890 = vsel %vm889, %v888, %v883
      %v891 = vadd.s32 %v844, 4294967240
      %v892 = vlaneseq
      %v893 = vshrl.u32 %v892, 7
      %v894 = vsub.s32 %v891, %v893
      %v895 = vrot.slane %v798, %v894
      %vm896 = vcmask 523712
      %v897 = vsel %vm896, %v895, %v890
      %v898 = vadd.s32 %v844, 4294967232
      %v899 = vlaneseq
      %v900 = vshrl.u32 %v899, 7
      %v901 = vsub.s32 %v898, %v900
      %v902 = vrot.slane %v799, %v901
      %vm903 = vcmask 589312
      %v904 = vsel %vm903, %v902, %v897
      %v905 = vadd.s32 %v844, 4294967224
      %v906 = vlaneseq
      %v907 = vshrl.u32 %v906, 7
      %v908 = vsub.s32 %v905, %v907
      %v909 = vrot.slane %v800, %v908
      %vm910 = vcmask 654912
      %v911 = vsel %vm910, %v909, %v904
      %v912 = vadd.s32 %v844, 4294967216
      %v913 = vlaneseq
      %v914 = vshrl.u32 %v913, 7
      %v915 = vsub.s32 %v912, %v914
      %v916 = vrot.slane %v801, %v915
      %vm917 = vcmask 720512
      %v918 = vsel %vm917, %v916, %v911
      %v919 = vadd.s32 %v844, 4294967208
      %v920 = vlaneseq
      %v921 = vshrl.u32 %v920, 7
      %v922 = vsub.s32 %v919, %v921
      %v923 = vrot.slane %v802, %v922
      %vm924 = vcmask 786112
      %v925 = vsel %vm924, %v923, %v918
      %v926 = vadd.s32 %v844, 4294967200
      %v927 = vlaneseq
      %v928 = vshrl.u32 %v927, 7
      %v929 = vsub.s32 %v926, %v928
      %v930 = vrot.slane %v803, %v929
      %vm931 = vcmask 851712
      %v932 = vsel %vm931, %v930, %v925
      %v933 = vadd.s32 %v844, 4294967192
      %v934 = vlaneseq
      %v935 = vshrl.u32 %v934, 7
      %v936 = vsub.s32 %v933, %v935
      %v937 = vrot.slane %v804, %v936
      %vm938 = vcmask 917312
      %v939 = vsel %vm938, %v937, %v932
      %v940 = vadd.s32 %v844, 4294967184
      %v941 = vlaneseq
      %v942 = vshrl.u32 %v941, 7
      %v943 = vsub.s32 %v940, %v942
      %v944 = vrot.slane %v805, %v943
      %vm945 = vcmask 982912
      %v946 = vsel %vm945, %v944, %v939
      %v947 = vadd.s32 %v844, 4294967176
      %v948 = vlaneseq
      %v949 = vshrl.u32 %v948, 7
      %v950 = vsub.s32 %v947, %v949
      %v951 = vrot.slane %v806, %v950
      %vm952 = vcmask 1048512
      %v953 = vsel %vm952, %v951, %v946
      %vm954 = vcmask 1042434
      %v955 = vsel %vm954, %v953, %v953
      %vm956 = vcmask 1043459
      %v957 = vsel %vm956, %v953, %v955
      %vm958 = vcmask 1044484
      %v959 = vsel %vm958, %v953, %v957
      %vm960 = vcmask 1045509
      %v961 = vsel %vm960, %v953, %v959
      %vm962 = vcmask 1046534
      %v963 = vsel %vm962, %v953, %v961
      %vm964 = vcmask 1047559
      %v965 = vsel %vm964, %v953, %v963
      %v968 = vmul.f32 %v818, %v965
      %v969 = vmul.f32 %v819, %v965
      %v970 = vmul.f32 %v820, %v965
      %v971 = vmul.f32 %v821, %v965
      %v972 = vmul.f32 %v822, %v965
      %v973 = vmul.f32 %v823, %v965
      %v974 = vmul.f32 %v824, %v965
      %v975 = vmul.f32 %v825, %v965
      %v976 = vmul.f32 %v826, %v953
      %v977 = vpack.c.bf16 %v969, %v968
      %v978 = vpack.c.bf16 %v971, %v970
      %v979 = vpack.c.bf16 %v973, %v972
      %v980 = vpack.c.bf16 %v975, %v974
      %v981 = vpack.c.bf16 %v976, %v976
      %v982 = vld [vmem:[#allocation4] sm:$0xff]
      %v983 = vld [vmem:[#allocation4 + $0x8] sm:$0xff]
      %v984 = vld [vmem:[#allocation4 + $0x10] sm:$0xff]
      %v985 = vld [vmem:[#allocation4 + $0x18] sm:$0xff]
      %v986 = vld [vmem:[#allocation4 + $0x20] sm:$0xff]
      %v987 = vld [vmem:[#allocation4 + $0x28] sm:$0xff]
      %v988 = vld [vmem:[#allocation4 + $0x30] sm:$0xff]
      %v989 = vld [vmem:[#allocation4 + $0x38] sm:$0xff]
      %v990 = vld [vmem:[#allocation4 + $0x40] sm:$0x1]
      %v991 = vpack.c.bf16 %v730, %v728
      %v992 = vpack.c.bf16 %v734, %v732
      %v993 = vpack.c.bf16 %v738, %v736
      %v994 = vpack.c.bf16 %v742, %v740
      %v995 = vpack.c.bf16 %v746, %v744
      %v996 = vpack.c.bf16 %v750, %v748
      %v997 = vpack.c.bf16 %v754, %v752
      %v998 = vpack.c.bf16 %v758, %v756
      %999 = vmatprep.subr.bf16.mxu0 0
      %1000 = vmatpush1.bf16.msra.mxu0 %v991
      %1001 = vmatprep.subr.bf16.mxu0 0
      %1002 = vmatpush1.bf16.msra.mxu0 %v992
      %1003 = vmatprep.subr.bf16.mxu0 0
      %1004 = vmatpush1.bf16.msra.mxu0 %v993
      %1005 = vmatprep.subr.bf16.mxu0 0
      %1006 = vmatpush1.bf16.msra.mxu0 %v994
      %1007 = vmatprep.subr.bf16.mxu0 0
      %1008 = vmatpush1.bf16.msra.mxu0 %v995
      %1009 = vmatprep.subr.bf16.mxu0 0
      %1010 = vmatpush1.bf16.msra.mxu0 %v996
      %1011 = vmatprep.subr.bf16.mxu0 0
      %1012 = vmatpush1.bf16.msra.mxu0 %v997
      %1013 = vmatprep.subr.bf16.mxu0 0
      %1014 = vmatpush1.bf16.msra.mxu0 %v998
      %1015 = vmatprep.subr.bf16.mxu0 0
      %1016 = vmatpush1.bf16.msra.mxu0 0
      %1017 = vmatprep.subr.bf16.mxu0 0
      %1018 = vmatpush1.bf16.msra.mxu0 0
      %1019 = vmatprep.subr.bf16.mxu0 0
      %1020 = vmatpush1.bf16.msra.mxu0 0
      %1021 = vmatprep.subr.bf16.mxu0 0
      %1022 = vmatpush1.bf16.msra.mxu0 0
      %1023 = vmatprep.subr.bf16.mxu0 0
      %1024 = vmatpush1.bf16.msra.mxu0 0
      %1025 = vmatprep.subr.bf16.mxu0 0
      %1026 = vmatpush1.bf16.msra.mxu0 0
      %1027 = vmatprep.subr.bf16.mxu0 0
      %1028 = vmatpush1.bf16.msra.mxu0 0
      %1029 = vmatprep.subr.bf16.mxu0 0
      %1030 = vmatpush1.bf16.msra.mxu0 0
      %1031 = vmatprep.mubr.bf16.mxu0 0
      %1032 = vmatmul.mubr.bf16.gmra.mrb[0].mxu0 %v977
      %v1033 = vpop.f32.mrb[0].mxu0
      %v1034 = vadd.f32 0.0, %v1033
      %v1035 = vpop.f32.mrb[0].mxu0
      %v1036 = vpop.f32.mrb[0].mxu0
      %v1037 = vadd.f32 0.0, %v1036
      %v1038 = vpop.f32.mrb[0].mxu0
      %1039 = vmatprep.mubr.bf16.mxu0 0
      %1040 = vmatmul.mubr.bf16.gmra.mrb[0].mxu0 %v978
      %v1041 = vpop.f32.mrb[0].mxu0
      %v1042 = vadd.f32 0.0, %v1041
      %v1043 = vpop.f32.mrb[0].mxu0
      %v1044 = vpop.f32.mrb[0].mxu0
      %v1045 = vadd.f32 0.0, %v1044
      %v1046 = vpop.f32.mrb[0].mxu0
      %1047 = vmatprep.mubr.bf16.mxu0 0
      %1048 = vmatmul.mubr.bf16.gmra.mrb[0].mxu0 %v979
      %v1049 = vpop.f32.mrb[0].mxu0
      %v1050 = vadd.f32 0.0, %v1049
      %v1051 = vpop.f32.mrb[0].mxu0
      %v1052 = vpop.f32.mrb[0].mxu0
      %v1053 = vadd.f32 0.0, %v1052
      %v1054 = vpop.f32.mrb[0].mxu0
      %1055 = vmatprep.mubr.bf16.mxu0 0
      %1056 = vmatmul.mubr.bf16.gmra.mrb[0].mxu0 %v980
      %v1057 = vpop.f32.mrb[0].mxu0
      %v1058 = vadd.f32 0.0, %v1057
      %v1059 = vpop.f32.mrb[0].mxu0
      %v1060 = vpop.f32.mrb[0].mxu0
      %v1061 = vadd.f32 0.0, %v1060
      %v1062 = vpop.f32.mrb[0].mxu0
      %1063 = vmatprep.mubr.bf16.mxu0 0
      %1064 = vmatmul.mubr.bf16.gmra.mrb[0].mxu0 %v981
      %v1065 = vpop.f32.mrb[0].mxu0
      %v1066 = vadd.f32 0.0, %v1065
      %v1067 = vpop.f32.mrb[0].mxu0
      %v1068 = vpop.f32.mrb[0].mxu0
      %v1069 = vpop.f32.mrb[0].mxu0
      %1070 = vdwg.mxu0
      %v1071 = vadd.f32 %v982, %v1034
      %v1072 = vadd.f32 %v983, %v1037
      %v1073 = vadd.f32 %v984, %v1042
      %v1074 = vadd.f32 %v985, %v1045
      %v1075 = vadd.f32 %v986, %v1050
      %v1076 = vadd.f32 %v987, %v1053
      %v1077 = vadd.f32 %v988, %v1058
      %v1078 = vadd.f32 %v989, %v1061
      %v1079 = vadd.f32 %v990, %v1066
      %1080 = vst [vmem:[#allocation4] sm:$0xff] %v1071
      %1081 = vst [vmem:[#allocation4 + $0x8] sm:$0xff] %v1072
      %1082 = vst [vmem:[#allocation4 + $0x10] sm:$0xff] %v1073
      %1083 = vst [vmem:[#allocation4 + $0x18] sm:$0xff] %v1074
      %1084 = vst [vmem:[#allocation4 + $0x20] sm:$0xff] %v1075
      %1085 = vst [vmem:[#allocation4 + $0x28] sm:$0xff] %v1076
      %1086 = vst [vmem:[#allocation4 + $0x30] sm:$0xff] %v1077
      %1087 = vst [vmem:[#allocation4 + $0x38] sm:$0xff] %v1078
      %1088 = vst [vmem:[#allocation4 + $0x40] sm:$0x1] %v1079
      // Predicated region
      $region45: #{sa_layer_seg.2} parent=39 // pred_check
        %p1089 = pneg %p276
      $region46: #{sa_layer_seg.2} parent=39 // pred_check_branch
        %1091 = sbr.rel (%p1089) target = $region48
      $region47: #{sa_layer_seg.2} parent=39 // pred_region
        %v1092 = vld [vmem:[#allocation4 + $0x40] sm:$0x1]
        %v1093 = vadd.f32 %v1092, 1e-09
        %v1094 = vrcp.pop %v1093
        %v1095 = vld [vmem:[#allocation4] sm:$0xff]
        %v1096 = vld [vmem:[#allocation4 + $0x8] sm:$0xff]
        %v1097 = vld [vmem:[#allocation4 + $0x10] sm:$0xff]
        %v1098 = vld [vmem:[#allocation4 + $0x18] sm:$0xff]
        %v1099 = vld [vmem:[#allocation4 + $0x20] sm:$0xff]
        %v1100 = vld [vmem:[#allocation4 + $0x28] sm:$0xff]
        %v1101 = vld [vmem:[#allocation4 + $0x30] sm:$0xff]
        %v1102 = vld [vmem:[#allocation4 + $0x38] sm:$0xff]
        %v1103 = vlaneseq
        %v1104 = vshrl.u32 %v1103, 7
        %v1105 = vsub.s32 0, %v1104
        %v1106 = vrot.slane %v1094, %v1105
        %v1107 = vmul.f32 %v1095, %v1106
        %v1108 = vmul.f32 %v1096, %v1106
        %v1109 = vmul.f32 %v1097, %v1106
        %v1110 = vmul.f32 %v1098, %v1106
        %v1111 = vmul.f32 %v1099, %v1106
        %v1112 = vmul.f32 %v1100, %v1106
        %v1113 = vmul.f32 %v1101, %v1106
        %v1114 = vmul.f32 %v1102, %v1106
        %v1115 = vld [vmem:[%s265] sm:$0xff]
        %v1116 = vld [vmem:[%s265 + $0x8] sm:$0xff]
        %v1117 = vld [vmem:[%s265 + $0x10] sm:$0xff]
        %v1118 = vld [vmem:[%s265 + $0x18] sm:$0xff]
        %v1119 = vld [vmem:[%s265 + $0x20] sm:$0xff]
        %v1120 = vld [vmem:[%s265 + $0x28] sm:$0xff]
        %v1121 = vld [vmem:[%s265 + $0x30] sm:$0xff]
        %v1122 = vld [vmem:[%s265 + $0x38] sm:$0xff]
        %v1123 = vsub.f32 %v1115, %v1107
        %v1124 = vsub.f32 %v1116, %v1108
        %v1125 = vsub.f32 %v1117, %v1109
        %v1126 = vsub.f32 %v1118, %v1110
        %v1127 = vsub.f32 %v1119, %v1111
        %v1128 = vsub.f32 %v1120, %v1112
        %v1129 = vsub.f32 %v1121, %v1113
        %v1130 = vsub.f32 %v1122, %v1114
        %v1131 = vpack.c.bf16 %v1124, %v1123
        %v1132 = vpack.c.bf16 %v1126, %v1125
        %v1133 = vpack.c.bf16 %v1128, %v1127
        %v1134 = vpack.c.bf16 %v1130, %v1129
        %v1135 = vld [vmem:[%s3] sm:$0xf]
        %v1136 = vld [vmem:[%s3 + $0x4] sm:$0xf]
        %v1137 = vld [vmem:[%s3 + $0x8] sm:$0xf]
        %v1138 = vld [vmem:[%s3 + $0xc] sm:$0xf]
        %v1139 = vld [vmem:[%s3 + $0x10] sm:$0xf]
        %v1140 = vld [vmem:[%s3 + $0x14] sm:$0xf]
        %v1141 = vld [vmem:[%s3 + $0x18] sm:$0xf]
        %v1142 = vld [vmem:[%s3 + $0x1c] sm:$0xf]
        %v1143 = vld [vmem:[%s4] sm:$0xff]
        %v1144 = vld [vmem:[%s4 + $0x8] sm:$0xff]
        %v1145 = vld [vmem:[%s4 + $0x10] sm:$0xff]
        %v1146 = vld [vmem:[%s4 + $0x18] sm:$0xff]
        %v1147 = vld [vmem:[%s4 + $0x20] sm:$0xff]
        %v1148 = vld [vmem:[%s4 + $0x28] sm:$0xff]
        %v1149 = vld [vmem:[%s4 + $0x30] sm:$0xff]
        %v1150 = vld [vmem:[%s4 + $0x38] sm:$0xff]
        %1152 = vset.pattern.permute.xlu0 0
        %1153 = vperm.xlu0 %1152, %v1143
        %v1154 = vpop.permute.xlu0 %1153
        %1157 = vset.pattern.permute.xlu0 0
        %1158 = vperm.xlu0 %1157, %v1144
        %v1159 = vpop.permute.xlu0 %1158
        %1162 = vset.pattern.permute.xlu0 0
        %1163 = vperm.xlu0 %1162, %v1145
        %v1164 = vpop.permute.xlu0 %1163
        %1167 = vset.pattern.permute.xlu0 0
        %1168 = vperm.xlu0 %1167, %v1146
        %v1169 = vpop.permute.xlu0 %1168
        %1172 = vset.pattern.permute.xlu0 0
        %1173 = vperm.xlu0 %1172, %v1147
        %v1174 = vpop.permute.xlu0 %1173
        %1177 = vset.pattern.permute.xlu0 0
        %1178 = vperm.xlu0 %1177, %v1148
        %v1179 = vpop.permute.xlu0 %1178
        %1182 = vset.pattern.permute.xlu0 0
        %1183 = vperm.xlu0 %1182, %v1149
        %v1184 = vpop.permute.xlu0 %1183
        %1187 = vset.pattern.permute.xlu0 0
        %1188 = vperm.xlu0 %1187, %v1150
        %v1189 = vpop.permute.xlu0 %1188
        %v1199 = vunpack.c.l.b16 %v1135
        %v1200 = vunpack.c.l.b16 %v1136
        %v1201 = vunpack.c.l.b16 %v1137
        %v1202 = vunpack.c.l.b16 %v1138
        %v1203 = vunpack.c.l.b16 %v1139
        %v1204 = vunpack.c.l.b16 %v1140
        %v1205 = vunpack.c.l.b16 %v1141
        %v1206 = vunpack.c.l.b16 %v1142
        %v1207 = vpack.c.b16 %v1200, %v1199
        %v1208 = vpack.c.b16 %v1202, %v1201
        %v1209 = vpack.c.b16 %v1204, %v1203
        %v1210 = vpack.c.b16 %v1206, %v1205
        %vm1211 = vcmask 523264
        %v1213 = vsel %vm1211, %v1207, 0
        %v1216 = vsel %vm1211, %v1208, 0
        %v1219 = vsel %vm1211, %v1209, 0
        %v1222 = vsel %vm1211, %v1210, 0
        %1224 = vmatprep.subr.bf16.mxu0 0
        %1225 = vmatpush1.bf16.msra.mxu0 %v1131
        %1226 = vmatprep.subr.bf16.mxu0 0
        %1227 = vmatpush1.bf16.msra.mxu0 %v1132
        %1228 = vmatprep.subr.bf16.mxu0 0
        %1229 = vmatpush1.bf16.msra.mxu0 %v1133
        %1230 = vmatprep.subr.bf16.mxu0 0
        %1231 = vmatpush1.bf16.msra.mxu0 %v1134
        %1232 = vmatprep.subr.bf16.mxu0 0
        %1233 = vmatpush1.bf16.msra.mxu0 0
        %1234 = vmatprep.subr.bf16.mxu0 0
        %1235 = vmatpush1.bf16.msra.mxu0 0
        %1236 = vmatprep.subr.bf16.mxu0 0
        %1237 = vmatpush1.bf16.msra.mxu0 0
        %1238 = vmatprep.subr.bf16.mxu0 0
        %1239 = vmatpush1.bf16.msra.mxu0 0
        %1240 = vmatprep.subr.bf16.mxu0 0
        %1241 = vmatpush1.bf16.msra.mxu0 0
        %1242 = vmatprep.subr.bf16.mxu0 0
        %1243 = vmatpush1.bf16.msra.mxu0 0
        %1244 = vmatprep.subr.bf16.mxu0 0
        %1245 = vmatpush1.bf16.msra.mxu0 0
        %1246 = vmatprep.subr.bf16.mxu0 0
        %1247 = vmatpush1.bf16.msra.mxu0 0
        %1248 = vmatprep.subr.bf16.mxu0 0
        %1249 = vmatpush1.bf16.msra.mxu0 0
        %1250 = vmatprep.subr.bf16.mxu0 0
        %1251 = vmatpush1.bf16.msra.mxu0 0
        %1252 = vmatprep.subr.bf16.mxu0 0
        %1253 = vmatpush1.bf16.msra.mxu0 0
        %1254 = vmatprep.subr.bf16.mxu0 0
        %1255 = vmatpush1.bf16.msra.mxu0 0
        %1256 = vmatprep.mubr.bf16.mxu0 0
        %1257 = vmatmul.mubr.bf16.gmra.mrb[0].mxu0 %v1213
        %v1258 = vpop.f32.mrb[0].mxu0
        %v1259 = vadd.f32 %v1154, %v1258
        %v1260 = vpop.f32.mrb[0].mxu0
        %v1261 = vpop.f32.mrb[0].mxu0
        %v1262 = vadd.f32 %v1159, %v1261
        %v1263 = vpop.f32.mrb[0].mxu0
        %1264 = vmatprep.mubr.bf16.mxu0 0
        %1265 = vmatmul.mubr.bf16.gmra.mrb[0].mxu0 %v1216
        %v1266 = vpop.f32.mrb[0].mxu0
        %v1267 = vadd.f32 %v1164, %v1266
        %v1268 = vpop.f32.mrb[0].mxu0
        %v1269 = vpop.f32.mrb[0].mxu0
        %v1270 = vadd.f32 %v1169, %v1269
        %v1271 = vpop.f32.mrb[0].mxu0
        %1272 = vmatprep.mubr.bf16.mxu0 0
        %1273 = vmatmul.mubr.bf16.gmra.mrb[0].mxu0 %v1219
        %v1274 = vpop.f32.mrb[0].mxu0
        %v1275 = vadd.f32 %v1174, %v1274
        %v1276 = vpop.f32.mrb[0].mxu0
        %v1277 = vpop.f32.mrb[0].mxu0
        %v1278 = vadd.f32 %v1179, %v1277
        %v1279 = vpop.f32.mrb[0].mxu0
        %1280 = vmatprep.mubr.bf16.mxu0 0
        %1281 = vmatmul.mubr.bf16.gmra.mrb[0].mxu0 %v1222
        %v1282 = vpop.f32.mrb[0].mxu0
        %v1283 = vadd.f32 %v1184, %v1282
        %v1284 = vpop.f32.mrb[0].mxu0
        %v1285 = vpop.f32.mrb[0].mxu0
        %v1286 = vadd.f32 %v1189, %v1285
        %v1287 = vpop.f32.mrb[0].mxu0
        %1288 = vdwg.mxu0
        %1289 = vadd.xlane.f32.xlu0 %v1259
        %v1290 = vpop.xlane.xlu0 %1289
        %1291 = vadd.xlane.f32.xlu0 %v1262
        %v1292 = vpop.xlane.xlu0 %1291
        %1293 = vadd.xlane.f32.xlu0 %v1267
        %v1294 = vpop.xlane.xlu0 %1293
        %1295 = vadd.xlane.f32.xlu0 %v1270
        %v1296 = vpop.xlane.xlu0 %1295
        %1297 = vadd.xlane.f32.xlu0 %v1275
        %v1298 = vpop.xlane.xlu0 %1297
        %1299 = vadd.xlane.f32.xlu0 %v1278
        %v1300 = vpop.xlane.xlu0 %1299
        %1301 = vadd.xlane.f32.xlu0 %v1283
        %v1302 = vpop.xlane.xlu0 %1301
        %1303 = vadd.xlane.f32.xlu0 %v1286
        %v1304 = vpop.xlane.xlu0 %1303
        %v1305 = vmul.f32 %v1259, %v1259
        %v1306 = vmul.f32 %v1262, %v1262
        %v1307 = vmul.f32 %v1267, %v1267
        %v1308 = vmul.f32 %v1270, %v1270
        %v1309 = vmul.f32 %v1275, %v1275
        %v1310 = vmul.f32 %v1278, %v1278
        %v1311 = vmul.f32 %v1283, %v1283
        %v1312 = vmul.f32 %v1286, %v1286
        %1313 = vadd.xlane.f32.xlu0 %v1305
        %v1314 = vpop.xlane.xlu0 %1313
        %1315 = vadd.xlane.f32.xlu0 %v1306
        %v1316 = vpop.xlane.xlu0 %1315
        %1317 = vadd.xlane.f32.xlu0 %v1307
        %v1318 = vpop.xlane.xlu0 %1317
        %1319 = vadd.xlane.f32.xlu0 %v1308
        %v1320 = vpop.xlane.xlu0 %1319
        %1321 = vadd.xlane.f32.xlu0 %v1309
        %v1322 = vpop.xlane.xlu0 %1321
        %1323 = vadd.xlane.f32.xlu0 %v1310
        %v1324 = vpop.xlane.xlu0 %1323
        %1325 = vadd.xlane.f32.xlu0 %v1311
        %v1326 = vpop.xlane.xlu0 %1325
        %1327 = vadd.xlane.f32.xlu0 %v1312
        %v1328 = vpop.xlane.xlu0 %1327
        %v1337 = vlaneseq
        %v1338 = vshrl.u32 %v1337, 7
        %v1339 = vsub.s32 %v844, %v1338
        %v1340 = vrot.slane %v1290, %v1339
        %v1341 = vlaneseq
        %v1342 = vshrl.u32 %v1341, 7
        %v1343 = vsub.s32 %v849, %v1342
        %v1344 = vrot.slane %v1292, %v1343
        %v1345 = vsel %vm854, %v1344, %v1340
        %v1346 = vlaneseq
        %v1347 = vshrl.u32 %v1346, 7
        %v1348 = vsub.s32 %v856, %v1347
        %v1349 = vrot.slane %v1294, %v1348
        %v1350 = vsel %vm861, %v1349, %v1345
        %v1351 = vlaneseq
        %v1352 = vshrl.u32 %v1351, 7
        %v1353 = vsub.s32 %v863, %v1352
        %v1354 = vrot.slane %v1296, %v1353
        %v1355 = vsel %vm868, %v1354, %v1350
        %v1356 = vlaneseq
        %v1357 = vshrl.u32 %v1356, 7
        %v1358 = vsub.s32 %v870, %v1357
        %v1359 = vrot.slane %v1298, %v1358
        %v1360 = vsel %vm875, %v1359, %v1355
        %v1361 = vlaneseq
        %v1362 = vshrl.u32 %v1361, 7
        %v1363 = vsub.s32 %v877, %v1362
        %v1364 = vrot.slane %v1300, %v1363
        %v1365 = vsel %vm882, %v1364, %v1360
        %v1366 = vlaneseq
        %v1367 = vshrl.u32 %v1366, 7
        %v1368 = vsub.s32 %v884, %v1367
        %v1369 = vrot.slane %v1302, %v1368
        %v1370 = vsel %vm889, %v1369, %v1365
        %v1371 = vlaneseq
        %v1372 = vshrl.u32 %v1371, 7
        %v1373 = vsub.s32 %v891, %v1372
        %v1374 = vrot.slane %v1304, %v1373
        %v1375 = vsel %vm896, %v1374, %v1370
        %v1385 = vlaneseq
        %v1386 = vshrl.u32 %v1385, 7
        %v1387 = vsub.s32 %v844, %v1386
        %v1388 = vrot.slane %v1314, %v1387
        %v1389 = vlaneseq
        %v1390 = vshrl.u32 %v1389, 7
        %v1391 = vsub.s32 %v849, %v1390
        %v1392 = vrot.slane %v1316, %v1391
        %v1393 = vsel %vm854, %v1392, %v1388
        %v1394 = vlaneseq
        %v1395 = vshrl.u32 %v1394, 7
        %v1396 = vsub.s32 %v856, %v1395
        %v1397 = vrot.slane %v1318, %v1396
        %v1398 = vsel %vm861, %v1397, %v1393
        %v1399 = vlaneseq
        %v1400 = vshrl.u32 %v1399, 7
        %v1401 = vsub.s32 %v863, %v1400
        %v1402 = vrot.slane %v1320, %v1401
        %v1403 = vsel %vm868, %v1402, %v1398
        %v1404 = vlaneseq
        %v1405 = vshrl.u32 %v1404, 7
        %v1406 = vsub.s32 %v870, %v1405
        %v1407 = vrot.slane %v1322, %v1406
        %v1408 = vsel %vm875, %v1407, %v1403
        %v1409 = vlaneseq
        %v1410 = vshrl.u32 %v1409, 7
        %v1411 = vsub.s32 %v877, %v1410
        %v1412 = vrot.slane %v1324, %v1411
        %v1413 = vsel %vm882, %v1412, %v1408
        %v1414 = vlaneseq
        %v1415 = vshrl.u32 %v1414, 7
        %v1416 = vsub.s32 %v884, %v1415
        %v1417 = vrot.slane %v1326, %v1416
        %v1418 = vsel %vm889, %v1417, %v1413
        %v1419 = vlaneseq
        %v1420 = vshrl.u32 %v1419, 7
        %v1421 = vsub.s32 %v891, %v1420
        %v1422 = vrot.slane %v1328, %v1421
        %v1423 = vsel %vm896, %v1422, %v1418
        %vm1425 = vcmask 1040384
        %v1426 = vsel %vm1425, %v1375, %v1423
        %vm1427 = vcmask 517120
        %1428 = vst.msk [vmem:[%s274] sm:$0x3] %vm1427, %v1426
        %v1429 = vpack.c.bf16 %v1262, %v1259
        %v1430 = vpack.c.bf16 %v1270, %v1267
        %v1431 = vpack.c.bf16 %v1278, %v1275
        %v1432 = vpack.c.bf16 %v1286, %v1283
        %v1437 = vunpack.c.l.b16 %v1429
        %v1438 = vunpack.c.h.b16 %v1429
        %v1439 = vunpack.c.l.b16 %v1430
        %v1440 = vunpack.c.h.b16 %v1430
        %v1441 = vunpack.c.l.b16 %v1431
        %v1442 = vunpack.c.h.b16 %v1431
        %v1443 = vunpack.c.l.b16 %v1432
        %v1444 = vunpack.c.h.b16 %v1432
        %v1445 = vpack.c.b16 %v1437, %v1437
        %v1446 = vpack.c.b16 %v1438, %v1438
        %v1447 = vpack.c.b16 %v1439, %v1439
        %v1448 = vpack.c.b16 %v1440, %v1440
        %v1449 = vpack.c.b16 %v1441, %v1441
        %v1450 = vpack.c.b16 %v1442, %v1442
        %v1451 = vpack.c.b16 %v1443, %v1443
        %v1452 = vpack.c.b16 %v1444, %v1444
        %1461 = vst [vmem:[%s270] sm:$0xf] %v1445
        %1462 = vst [vmem:[%s270 + $0x4] sm:$0xf] %v1446
        %1463 = vst [vmem:[%s270 + $0x8] sm:$0xf] %v1447
        %1464 = vst [vmem:[%s270 + $0xc] sm:$0xf] %v1448
        %1465 = vst [vmem:[%s270 + $0x10] sm:$0xf] %v1449
        %1466 = vst [vmem:[%s270 + $0x14] sm:$0xf] %v1450
        %1467 = vst [vmem:[%s270 + $0x18] sm:$0xf] %v1451
        %1468 = vst [vmem:[%s270 + $0x1c] sm:$0xf] %v1452
      $region48: #{sa_layer_seg.2} parent=39 // pred_fallthru
        _
      %p1469 = scmp.lt.s32.totalorder %s22, 1
      %s1470 = scalar_select %p1469, %s22, 1
      %s1471 = smul.addr %s1470, 8
      %s1472 = smul.addr %s1471, 4
      %s1473 = scalar_lea.vmem %s5, %s1472
      %p1474 = scmp.lt.s32.totalorder %s22, 1
      %s1475 = scalar_select %p1474, %s22, 1
      %s1476 = smul.addr %s1475, 2
      %s1477 = scalar_lea.vmem %s6, %s1476
      // Predicated region
      $region49: #{sa_layer_seg.2} parent=39 // pred_check
        %p1478 = pneg %p158
      $region50: #{sa_layer_seg.2} parent=39 // pred_check_branch
        %1480 = sbr.rel (%p1478) target = $region52
      $region51: #{sa_layer_seg.2} parent=39 // pred_region
        _
      $region52: #{sa_layer_seg.2} parent=39 // pred_fallthru
        _
      // Predicated region
      $region53: #{sa_layer_seg.2} parent=39 // pred_check
        %p1481 = pneg %p184
      $region54: #{sa_layer_seg.2} parent=39 // pred_check_branch
        %1483 = sbr.rel (%p1481) target = $region56
      $region55: #{sa_layer_seg.2} parent=39 // pred_region
        _
      $region56: #{sa_layer_seg.2} parent=39 // pred_fallthru
        _
    $region40: #{sa_layer_seg.2} parent=5 // pred_fallthru
      _
    %p1484 = scmp.le.s32.totalorder 2, %s13
    // Predicated region
    $region57: #{sa_layer_seg.2} parent=5 // pred_check
      %p1485 = pneg %p1484
    $region58: #{sa_layer_seg.2} parent=5 // pred_check_branch
      %1487 = sbr.rel (%p1485) target = $region60
    $region59: #{sa_layer_seg.2} parent=5 // pred_region
      %s1488 = ssub.s32 %s13, 2
      // Predicated region
      $region61: #{sa_layer_seg.2} parent=59 // pred_check
        %p1489 = pneg %p164
      $region62: #{sa_layer_seg.2} parent=59 // pred_check_branch
        %1491 = sbr.rel (%p1489) target = $region64
      $region63: #{sa_layer_seg.2} parent=59 // pred_region
        %p1492 = scmp.lt.s32.totalorder %s24, 1
        %s1493 = scalar_select %p1492, %s24, 1
        %s1494 = smul.addr %s1493, 8
        %s1495 = smul.addr %s1494, 4
        %s1496 = scalar_lea.vmem %s5, %s1495
      $region64: #{sa_layer_seg.2} parent=59 // pred_fallthru
        _
      // Predicated region
      $region65: #{sa_layer_seg.2} parent=59 // pred_check
        %p1497 = pneg %p190
      $region66: #{sa_layer_seg.2} parent=59 // pred_check_branch
        %1499 = sbr.rel (%p1497) target = $region68
      $region67: #{sa_layer_seg.2} parent=59 // pred_region
        %p1500 = scmp.lt.s32.totalorder %s24, 1
        %s1501 = scalar_select %p1500, %s24, 1
        %s1502 = smul.addr %s1501, 2
        %s1503 = scalar_lea.vmem %s6, %s1502
      $region68: #{sa_layer_seg.2} parent=59 // pred_fallthru
        _
    $region60: #{sa_layer_seg.2} parent=5 // pred_fallthru
      _
  $region6: #{sa_layer_seg.2} parent=0 // loop_footer
    %s17 = sadd.s32 1, %s13
  $region7: #{sa_layer_seg.2} parent=0 // loop_footer_branch
    %12 = sbr.rel target = $region3
  $region8: #{sa_layer_seg.2} parent=0 // loop_exit
    _

</llo_original>
